<compile_context>
chip_gen: v6e
topology: v6e:2x2x1
jax: 0.10.0
libtpu: 0.0.40
codegen_flags: <defaults>
</compile_context>

<pallas_src>
import functools
import math

import jax
import jax.numpy as jnp
from jax import lax
from jax.experimental import pallas as pl
from jax.experimental.pallas import tpu as pltpu


# ----------------------------------------------------------------------------
# Helpers
# ----------------------------------------------------------------------------
def _round_up(n, m):
    return ((n + m - 1) // m) * m


def _pow2_tile(n, cap):
    """Largest power-of-two tile >= 8 and <= min(cap, round_up(n, 8))."""
    limit = max(8, min(cap, _round_up(n, 8)))
    t = 8
    while t * 2 <= limit:
        t *= 2
    return t


def _vmem_limit_bytes():
    """Chip-aware VMEM budget: capacity minus ~8 MiB headroom, capped at 100 MiB
    (-> ~56 MiB on v7x, 100 MiB on v5e/v6e)."""
    try:
        cap = int(pltpu.get_tpu_info().vmem_capacity_bytes)
    except Exception:
        cap = 64 * 1024 * 1024          # conservative fallback (v7x-sized)
    return int(min(cap - 8 * 1024 * 1024, 100 * 1024 * 1024))


def _probe_copy_kernel(x_ref, o_ref):
    o_ref[...] = x_ref[...]


@functools.lru_cache(maxsize=1)
def _single_buffer_ok():
    """Probe whether pipeline_mode=pl.Buffered(1) (single-buffered constant blocks) works
    on this JAX/libtpu; fall back to default double buffering if not."""
    try:
        spec = pl.BlockSpec((8, 128), lambda i: (0, 0), pipeline_mode=pl.Buffered(1))
        out = pl.pallas_call(
            _probe_copy_kernel,
            grid=(1,),
            in_specs=[spec],
            out_specs=pl.BlockSpec((8, 128), lambda i: (0, 0)),
            out_shape=jax.ShapeDtypeStruct((8, 128), jnp.float32),
        )(jnp.zeros((8, 128), jnp.float32))
        jax.block_until_ready(out)
        return True
    except Exception:
        return False


def _const_spec(shape, index_map):
    """BlockSpec for inputs whose block index never changes (weights): single-buffer them
    so they don't pay 2x VMEM (critical for the HxH weights at large H on v7x)."""
    if _single_buffer_ok():
        return pl.BlockSpec(shape, index_map, pipeline_mode=pl.Buffered(1))
    return pl.BlockSpec(shape, index_map)


# ----------------------------------------------------------------------------
# Kernel 0: per-head projection + Theta rotation (hoisted out of the kv loop).
# Grid: (batch, seq_tile).  Outputs are (B, heads, S_pad, hs) so kernel 1 indexes heads on
# a leading dim (no lane slicing in the inner loop).
# ----------------------------------------------------------------------------
def project_rotate_kernel(x_ref, wqkv_ref, theta_ref,
                          qre_ref, qim_ref, kre_ref, kim_ref, v_ref,
                          *, matmul_dtype):
    heads, hs, _ = wqkv_ref.shape
    TS = x_ref.shape[1]
    si = pl.program_id(1)
    out_dt = qre_ref.dtype

    def mm(a, b):
        return jnp.dot(a.astype(matmul_dtype), b.astype(matmul_dtype),
                       preferred_element_type=jnp.float32)

    x = x_ref[0]                                                         # (TS, H)
    # 1-based positions: Theta_n = exp(i * n * theta), n = 1..S.
    n = (lax.broadcasted_iota(jnp.int32, (TS, 1), 0) + si * TS + 1).astype(jnp.float32)

    for h in range(heads):      # static unroll; switch to lax.fori_loop for heads >= 8
        x_h = x[:, h * hs:(h + 1) * hs]                                  # (TS, hs)
        p = mm(x_h, wqkv_ref[h])                                         # (TS, 3*hs): Q|K|V
        pq = p[:, :hs]
        pk = p[:, hs:2 * hs]
        pv = p[:, 2 * hs:]
        ang = n * theta_ref[h]                                           # (TS, hs)
        c = jnp.cos(ang)
        s = jnp.sin(ang)
        qre_ref[0, h] = (pq * c).astype(out_dt)
        qim_ref[0, h] = (pq * s).astype(out_dt)
        kre_ref[0, h] = (pk * c).astype(out_dt)
        kim_ref[0, h] = (-(pk * s)).astype(out_dt)
        v_ref[0, h] = pv.astype(out_dt)


# ----------------------------------------------------------------------------
# Kernel 1: flash-style retention (outer-product decay) + complex group norm.
# Grid: (batch, q_block, kv_block); kv is the innermost reduction axis.
# ----------------------------------------------------------------------------
def retention_flash_kernel(lg_ref,                     # SMEM prefetch: log(gamma) per head
                           qre_ref, qim_ref,           # (1, heads, TQ, hs) resident per q tile
                           kre_ref, kim_ref, v_ref,    # (1, heads, TK, hs), causal-clamped DMA
                           gnw_ref, gnb_ref,           # (1, H)
                           yre_ref, yim_ref,           # (1, TQ, H)
                           accre_s, accim_s,           # (heads, TQ, hs) f32 scratch
                           *, matmul_dtype):
    heads, TQ, hs = accre_s.shape
    TK = kre_ref.shape[2]

    qi = pl.program_id(1)
    ki = pl.program_id(2)
    nk = pl.num_programs(2)
    q_lo = qi * TQ
    k_lo = ki * TK
    q_hi = q_lo + TQ - 1
    k_hi = k_lo + TK - 1

    def mm(a, b):
        return jnp.dot(a.astype(matmul_dtype), b.astype(matmul_dtype),
                       preferred_element_type=jnp.float32)

    def mm_nt(a, b):   # (q, d) x (k, d) -> (q, k), contraction over the last dims
        return jnp.einsum('qd,kd->qk', a.astype(matmul_dtype), b.astype(matmul_dtype),
                          preferred_element_type=jnp.float32)

    @pl.when(ki == 0)
    def _init():
        accre_s[...] = jnp.zeros_like(accre_s)
        accim_s[...] = jnp.zeros_like(accim_s)

    def tile_update(need_mask):
        base = (q_lo - k_lo).astype(jnp.float32)
        q_loc = lax.broadcasted_iota(jnp.int32, (TQ, 1), 0).astype(jnp.float32)
        k_loc = lax.broadcasted_iota(jnp.int32, (1, TK), 1).astype(jnp.float32)
        if need_mask:
            qp = lax.broadcasted_iota(jnp.int32, (TQ, TK), 0) + q_lo
            kp = lax.broadcasted_iota(jnp.int32, (TQ, TK), 1) + k_lo
            causal = qp >= kp                       # shared across heads
        for h in range(heads):   # static unroll; switch to lax.fori_loop for heads >= 8
            lg = lg_ref[h]
            # Outer-product decay: gamma^(q_glob - k_lo) * gamma^(-k_loc)  (TQ+TK exps,
            # not TQ*TK).  RetNet gammas are all close to 1, so both factors stay well
            # within f32 range for any realistic tile size.
            d = jnp.exp(lg * (base + q_loc)) * jnp.exp(-lg * k_loc)      # (TQ, TK)
            if need_mask:
                d = jnp.where(causal, d, 0.0)
            q_re = qre_ref[0, h]
            q_im = qim_ref[0, h]
            k_re = kre_ref[0, h]
            k_im = kim_ref[0, h]
            # Karatsuba complex matmul: 3 MXU calls instead of 4.
            t1 = mm_nt(q_re, k_re)
            t2 = mm_nt(q_im, k_im)
            t3 = mm_nt(q_re + q_im, k_re + k_im)
            att_re = (t1 - t2) * d
            att_im = (t3 - t1 - t2) * d
            v_h = v_ref[0, h]
            accre_s[h] = accre_s[h] + mm(att_re, v_h)
            accim_s[h] = accim_s[h] + mm(att_im, v_h)

    # Strictly-below-diagonal kv tiles: no iota / compare / select at all.
    @pl.when(k_hi <= q_lo)
    def _below():
        tile_update(False)

    # Diagonal-crossing tiles: apply the causal mask.  Strictly-above tiles run neither
    # branch, and their DMA is skipped via the clamped kv index_map in the wrapper.
    @pl.when(jnp.logical_and(k_lo <= q_hi, k_hi > q_lo))
    def _diag():
        tile_update(True)

    # Last kv step: per-head complex group norm, lane-dense store into (TQ, H).
    @pl.when(ki == nk - 1)
    def _finalize():
        gnw = gnw_ref[...]
        gnb = gnb_ref[...]

        def head_norm(h):
            yr = accre_s[h]
            yi = accim_s[h]
            mu_r = jnp.mean(yr, axis=-1, keepdims=True)
            mu_i = jnp.mean(yi, axis=-1, keepdims=True)
            cr = yr - mu_r
            ci = yi - mu_i
            var = jnp.mean(cr * cr + ci * ci, axis=-1, keepdims=True)
            inv = lax.rsqrt(var + 1e-5)
            w_h = gnw[:, h * hs:(h + 1) * hs]
            b_h = gnb[:, h * hs:(h + 1) * hs]
            return cr * inv * w_h + b_h, ci * inv * w_h

        if hs % 128 == 0:
            # Lane-aligned direct per-head stores (no concat copy).
            for h in range(heads):
                o_re, o_im = head_norm(h)
                yre_ref[0, :, h * hs:(h + 1) * hs] = o_re
                yim_ref[0, :, h * hs:(h + 1) * hs] = o_im
        else:
            outs_re, outs_im = [], []
            for h in range(heads):
                o_re, o_im = head_norm(h)
                outs_re.append(o_re)
                outs_im.append(o_im)
            yre_ref[0] = jnp.concatenate(outs_re, axis=-1)
            yim_ref[0] = jnp.concatenate(outs_im, axis=-1)


# ----------------------------------------------------------------------------
# Kernel 2: row-tiled  swish(X @ W_G) + Y  ->  @ W_O  (complex, expanded re/im).
# ----------------------------------------------------------------------------
def msr_output_kernel(x_ref, yre_ref, yim_ref, wg_ref, wore_ref, woim_ref,
                      ore_ref, oim_ref, *, matmul_dtype):
    H = x_ref.shape[1]

    def mm(a, b):
        return jnp.dot(a.astype(matmul_dtype), b.astype(matmul_dtype),
                       preferred_element_type=jnp.float32)

    x = x_ref[...]                               # (TM, H) real rows (imag(X) == 0)
    g = mm(x, wg_ref[...])                       # (TM, 2H): [Re(X@W_G) | Im(X@W_G)] packed
    a = g[:, :H]
    b = g[:, H:]

    # Numerically stable complex sigmoid, t = exp(-|a|) in (0, 1].  Exact reciprocal so
    # the true pole (a ~ 0, cos(b) ~ -1) produces inf rather than approx garbage.
    t = jnp.exp(-jnp.abs(a))
    cb = jnp.cos(b)
    sb = jnp.sin(b)
    denom = 1.0 + 2.0 * t * cb + t * t
    inv_den = pl.reciprocal(denom, approx=False)
    s_re = jnp.where(a >= 0.0, 1.0 + t * cb, t * (cb + t)) * inv_den
    s_im = (t * sb) * inv_den
    # swish(z) = z * sigmoid(z)
    sw_re = a * s_re - b * s_im
    sw_im = a * s_im + b * s_re

    z_re = sw_re + yre_ref[...]
    z_im = sw_im + yim_ref[...]

    wore = wore_ref[...]
    woim = woim_ref[...]
    # Karatsuba complex matmul: 3 MXU calls instead of 4.
    t1 = mm(z_re, wore)
    t2 = mm(z_im, woim)
    t3 = mm(z_re + z_im, wore + woim)
    ore_ref[...] = t1 - t2
    oim_ref[...] = t3 - t1 - t2


# ----------------------------------------------------------------------------
# Wrapper
# ----------------------------------------------------------------------------
def multi_scale_retention_forward(x, params, *, matmul_dtype=jnp.float32,
                                  q_tile=256, kv_tile=256, proj_tile=256, row_tile=512):
    """Forward pass of MultiScaleRetention (parallel form). Returns complex64 (B, S, H).

    matmul_dtype=jnp.bfloat16 enables bf16 MXU operands (f32 accumulation) and bf16
    Q/K/V intermediates on v5e/v6e/v7x; the self-test below uses the f32 path to keep the
    strict tolerance vs the complex64 reference.  On 128-MiB parts (v5e/v6e) consider
    kv_tile=512 / row_tile=1024; keep the defaults on v7x (64 MiB VMEM).
    """
    B, S, H = x.shape
    heads = params['heads']
    assert H % heads == 0
    hs = H // heads

    inter_dtype = jnp.bfloat16 if matmul_dtype == jnp.bfloat16 else jnp.float32
    vmem_limit = _vmem_limit_bytes()

    # Tiling: power-of-two tiles; pad S so every tile divides it.  Zero padding is exact:
    # padded K/V rows are zero, padded q rows are sliced away before kernel 2.
    TQ = _pow2_tile(S, q_tile)
    TK = _pow2_tile(S, kv_tile)
    TS = _pow2_tile(S, proj_tile)
    S_pad = _round_up(S, max(TQ, TK, TS))
    x_pad = x if S_pad == S else jnp.pad(x, ((0, 0), (0, S_pad - S), (0, 0)))
    nS, nq, nk = S_pad // TS, S_pad // TQ, S_pad // TK

    # ---- Kernel 0: projection + rotation, hoisted out of the kv loop -------------------
    wqkv = jnp.concatenate([params['W_Q'], params['W_K'], params['W_V']], axis=-1)
    theta3 = params['theta'].reshape(heads, 1, hs).astype(jnp.float32)

    kernel0 = functools.partial(project_rotate_kernel, matmul_dtype=matmul_dtype)
    x_spec = pl.BlockSpec((1, TS, H), lambda b, s: (b, s, 0))
    head_out_spec = pl.BlockSpec((1, heads, TS, hs), lambda b, s: (b, 0, s, 0))
    head_shape = jax.ShapeDtypeStruct((B, heads, S_pad, hs), inter_dtype)

    qre, qim, kre, kim, v = pl.pallas_call(
        kernel0,
        grid=(B, nS),
        in_specs=[x_spec,
                  _const_spec((heads, hs, 3 * hs), lambda b, s: (0, 0, 0)),
                  _const_spec((heads, 1, hs), lambda b, s: (0, 0, 0))],
        out_specs=[head_out_spec] * 5,
        out_shape=[head_shape] * 5,
        compiler_params=pltpu.CompilerParams(
            dimension_semantics=("parallel", "parallel"),
            vmem_limit_bytes=vmem_limit),
    )(x_pad, wqkv, theta3)

    # ---- Kernel 1: flash retention + complex group norm --------------------------------
    log_gammas = jnp.log(params['gammas']).astype(jnp.float32)
    gnw = params['gn_weight'].reshape(1, H).astype(jnp.float32)
    gnb = params['gn_bias'].reshape(1, H).astype(jnp.float32)

    def last_k(q):                        # last kv block a given q tile can ever see
        return (q * TQ + TQ - 1) // TK

    q_spec = pl.BlockSpec((1, heads, TQ, hs), lambda b, q, k, lg: (b, 0, q, 0))
    # Clamped kv index_map: strictly-above-diagonal steps reuse the resident block, so
    # pl.when skips both the compute AND the DMA for them.
    kv_spec = pl.BlockSpec((1, heads, TK, hs),
                           lambda b, q, k, lg: (b, 0, jnp.minimum(k, last_k(q)), 0))
    gn_spec = _const_spec((1, H), lambda b, q, k, lg: (0, 0))
    y_spec = pl.BlockSpec((1, TQ, H), lambda b, q, k, lg: (b, q, 0))

    kernel1 = functools.partial(retention_flash_kernel, matmul_dtype=matmul_dtype)
    yre, yim = pl.pallas_call(
        kernel1,
        grid_spec=pltpu.PrefetchScalarGridSpec(
            num_scalar_prefetch=1,
            grid=(B, nq, nk),
            in_specs=[q_spec, q_spec, kv_spec, kv_spec, kv_spec, gn_spec, gn_spec],
            out_specs=[y_spec, y_spec],
            scratch_shapes=[pltpu.VMEM((heads, TQ, hs), jnp.float32)] * 2,
        ),
        out_shape=[jax.ShapeDtypeStruct((B, S_pad, H), jnp.float32)] * 2,
        compiler_params=pltpu.CompilerParams(
            dimension_semantics=("parallel", "parallel", "arbitrary"),
            vmem_limit_bytes=vmem_limit),
    )(log_gammas, qre, qim, kre, kim, v, gnw, gnb)

    if S_pad != S:
        yre = yre[:, :S, :]
        yim = yim[:, :S, :]

    # ---- Kernel 2: swish(X @ W_G) + Y -> @ W_O (row-tiled, resident weights) -----------
    rows = B * S
    TM = _pow2_tile(rows, row_tile)
    rows_pad = _round_up(rows, TM)
    x2 = x.reshape(rows, H)
    yre2 = yre.reshape(rows, H)
    yim2 = yim.reshape(rows, H)
    if rows_pad != rows:
        pad = ((0, rows_pad - rows), (0, 0))
        x2 = jnp.pad(x2, pad)
        yre2 = jnp.pad(yre2, pad)
        yim2 = jnp.pad(yim2, pad)

    wg_packed = jnp.concatenate([params['W_G_re'], params['W_G_im']], axis=-1)  # (H, 2H)

    kernel2 = functools.partial(msr_output_kernel, matmul_dtype=matmul_dtype)
    row_spec = pl.BlockSpec((TM, H), lambda i: (i, 0))
    ore, oim = pl.pallas_call(
        kernel2,
        grid=(rows_pad // TM,),
        in_specs=[row_spec, row_spec, row_spec,
                  _const_spec((H, 2 * H), lambda i: (0, 0)),
                  _const_spec((H, H), lambda i: (0, 0)),
                  _const_spec((H, H), lambda i: (0, 0))],
        out_specs=[row_spec, row_spec],
        out_shape=[jax.ShapeDtypeStruct((rows_pad, H), jnp.float32)] * 2,
        compiler_params=pltpu.CompilerParams(
            dimension_semantics=("parallel",),
            vmem_limit_bytes=vmem_limit),
    )(x2, yre2, yim2, wg_packed, params['W_O_re'], params['W_O_im'])

    if rows_pad != rows:
        ore = ore[:rows]
        oim = oim[:rows]
    return lax.complex(ore, oim).reshape(B, S, H)    # complex64, like the PyTorch module


# ----------------------------------------------------------------------------
# Plain-JAX (complex64) reference, for correctness check only.
# ----------------------------------------------------------------------------
def reference_forward(x, params):
    B, S, H = x.shape
    heads = params['heads']
    hs = H // heads
    Xc = x.astype(jnp.complex64)
    ns = jnp.arange(1, S + 1, dtype=jnp.float32)
    idx = jnp.arange(S)
    expo = (idx[:, None] - idx[None, :]).astype(jnp.float32)

    outs = []
    for h in range(heads):
        Xh = Xc[:, :, h * hs:(h + 1) * hs]
        th = params['theta'][h]
        Theta = jnp.exp(1j * ns[:, None].astype(jnp.complex64) * th[None, :].astype(jnp.complex64))
        WQ = params['W_Q'][h].astype(jnp.complex64)
        WK = params['W_K'][h].astype(jnp.complex64)
        WV = params['W_V'][h].astype(jnp.complex64)
        Q = (Xh @ WQ) * Theta[None]
        K = (Xh @ WK) * jnp.conj(Theta)[None]
        V = Xh @ WV
        gamma = params['gammas'][h]
        D = jnp.where(expo >= 0.0, gamma ** expo, 0.0).astype(jnp.complex64)
        att = jnp.einsum('bqd,bkd->bqk', Q, K) * D[None]
        outs.append(jnp.einsum('bqk,bkd->bqd', att, V))
    Y = jnp.concatenate(outs, axis=2)

    Yg = Y.reshape(B, S, heads, hs)
    mu = jnp.mean(Yg, axis=-1, keepdims=True)
    c = Yg - mu
    var = jnp.mean(jnp.real(c * jnp.conj(c)), axis=-1, keepdims=True)
    Yn = (c / jnp.sqrt(var + 1e-5)).reshape(B, S, H)
    Yn = Yn * params['gn_weight'].astype(jnp.complex64) + params['gn_bias'].astype(jnp.complex64)

    WG = params['W_G_re'] + 1j * params['W_G_im']
    WO = params['W_O_re'] + 1j * params['W_O_im']
    G = Xc @ WG
    sw = G * (1.0 / (1.0 + jnp.exp(-G)))
    return (sw + Yn) @ WO


# ----------------------------------------------------------------------------
def make_params(key, hidden_size, heads):
    hs = hidden_size // heads
    ks = jax.random.split(key, 9)
    # Synthetic deterministic init (same shapes as the PyTorch module; no checkpoint).
    params = {
        'heads': heads,
        'W_Q': jax.random.normal(ks[0], (heads, hs, hs), jnp.float32) / hs,
        'W_K': jax.random.normal(ks[1], (heads, hs, hs), jnp.float32) / hs,
        'W_V': jax.random.normal(ks[2], (heads, hs, hs), jnp.float32) / hs,
        'theta': jax.random.normal(ks[3], (heads, hs), jnp.float32) / hs,
        'W_G_re': jax.random.normal(ks[4], (hidden_size, hidden_size), jnp.float32)
                  / (math.sqrt(2.0) * hidden_size),
        'W_G_im': jax.random.normal(ks[5], (hidden_size, hidden_size), jnp.float32)
                  / (math.sqrt(2.0) * hidden_size),
        'W_O_re': jax.random.normal(ks[6], (hidden_size, hidden_size), jnp.float32)
                  / (math.sqrt(2.0) * hidden_size),
        'W_O_im': jax.random.normal(ks[7], (hidden_size, hidden_size), jnp.float32)
                  / (math.sqrt(2.0) * hidden_size),
        'gn_weight': jnp.ones((hidden_size,), jnp.float32),
        'gn_bias': jnp.zeros((hidden_size,), jnp.float32),
        'gammas': 1.0 - jnp.exp(
            jnp.linspace(math.log(1.0 / 32.0), math.log(1.0 / 512.0), heads)
        ).astype(jnp.float32),
    }
    return params


if __name__ == "__main__":
    batch, seq, hidden, heads = 2, 8, 32, 4

    key = jax.random.PRNGKey(0)
    k_params, k_x, k_x2 = jax.random.split(key, 3)
    params = make_params(k_params, hidden, heads)
    x = jax.random.normal(k_x, (batch, seq, hidden), jnp.float32)

    # f32 MXU operands for the strict correctness check; pass matmul_dtype=jnp.bfloat16
    # for the fast path on v5e/v6e/v7x.
    out = multi_scale_retention_forward(x, params)
    out = jax.block_until_ready(out)

    ref = jax.block_until_ready(reference_forward(x, params))
    max_err = float(jnp.max(jnp.abs(out - ref)))
    assert out.shape == (batch, seq, hidden) and out.dtype == jnp.complex64
    assert max_err < 1e-3, f"mismatch vs reference: {max_err}"

    # Multi-tile exercise (review concern): S=40 with 8-wide tiles -> nq=nk=5, so the
    # cross-kv accumulation, diag/below branch split, causal DMA clamp and
    # finalize-at-last-k paths are all active.
    x_mt = jax.random.normal(k_x2, (batch, 40, hidden), jnp.float32)
    out_mt = jax.block_until_ready(
        multi_scale_retention_forward(x_mt, params,
                                      q_tile=8, kv_tile=8, proj_tile=8, row_tile=8))
    ref_mt = jax.block_until_ready(reference_forward(x_mt, params))
    err_mt = float(jnp.max(jnp.abs(out_mt - ref_mt)))
    assert err_mt < 1e-3, f"multi-tile mismatch vs reference: {err_mt}"

    print("KERNEL_OK")
</pallas_src>

<mosaic_0001>
module attributes {stable_mosaic.version = 11 : i64} {
  func.func @_probe_copy_kernel(%arg0: i32, %arg1: memref<8x128xf32, #tpu.memory_space<vmem>>, %arg2: memref<8x128xf32, #tpu.memory_space<vmem>>) attributes {dimension_semantics = [#tpu.dimension_semantics<arbitrary>], iteration_bounds = array<i64: 1>, scalar_prefetch = 0 : i64, scratch_operands = 0 : i64, tpu.core_type = #tpu.core_type<tc>, window_params = [{pipeline_mode = #tpu.pipeline_mode<synchronous>, transform_indices = @transform_0, window_bounds = array<i64: 8, 128>}, {pipeline_mode = #tpu.pipeline_mode<synchronous>, transform_indices = @transform_1, window_bounds = array<i64: 8, 128>}]} {
    %c0 = arith.constant 0 : index
    %c0_0 = arith.constant 0 : index
    %0 = vector.load %arg1[%c0, %c0_0] : memref<8x128xf32, #tpu.memory_space<vmem>>, vector<8x128xf32>
    %c0_1 = arith.constant 0 : index
    %c0_2 = arith.constant 0 : index
    %1 = vector.load %arg2[%c0_1, %c0_2] : memref<8x128xf32, #tpu.memory_space<vmem>>, vector<8x128xf32>
    tpu.vector_store %arg2[%c0_1, %c0_2], %0 {strides = array<i32>} : memref<8x128xf32, #tpu.memory_space<vmem>>, vector<8x128xf32>,
    return
  }
  func.func @transform_0(%arg0: i32) -> (i32, i32) {
    %c0_i32 = arith.constant 0 : i32
    %c0_i32_0 = arith.constant 0 : i32
    %c0_i32_1 = arith.constant 0 : i32
    return %c0_i32, %c0_i32_0 : i32, i32
  }
  func.func @transform_1(%arg0: i32) -> (i32, i32) {
    %c0_i32 = arith.constant 0 : i32
    %c0_i32_0 = arith.constant 0 : i32
    %c0_i32_1 = arith.constant 0 : i32
    return %c0_i32, %c0_i32_0 : i32, i32
  }
}

module attributes {stable_mosaic.version = 11 : i64} {
  func.func @project_rotate_kernel(%arg0: i32, %arg1: i32, %arg2: memref<1x8x32xf32, #tpu.memory_space<vmem>>, %arg3: memref<4x8x24xf32, #tpu.memory_space<vmem>>, %arg4: memref<4x1x8xf32, #tpu.memory_space<vmem>>, %arg5: memref<1x4x8x8xf32, #tpu.memory_space<vmem>>, %arg6: memref<1x4x8x8xf32, #tpu.memory_space<vmem>>, %arg7: memref<1x4x8x8xf32, #tpu.memory_space<vmem>>, %arg8: memref<1x4x8x8xf32, #tpu.memory_space<vmem>>, %arg9: memref<1x4x8x8xf32, #tpu.memory_space<vmem>>) attributes {dimension_semantics = [#tpu.dimension_semantics<parallel>, #tpu.dimension_semantics<parallel>], iteration_bounds = array<i64: 2, 1>, scalar_prefetch = 0 : i64, scratch_operands = 0 : i64, tpu.core_type = #tpu.core_type<tc>, window_params = [{transform_indices = @transform_0, window_bounds = array<i64: 1, 8, 32>}, {pipeline_mode = #tpu.pipeline_mode<synchronous>, transform_indices = @transform_1, window_bounds = array<i64: 4, 8, 24>}, {pipeline_mode = #tpu.pipeline_mode<synchronous>, transform_indices = @transform_2, window_bounds = array<i64: 4, 1, 8>}, {transform_indices = @transform_3, window_bounds = array<i64: 1, 4, 8, 8>}, {transform_indices = @transform_4, window_bounds = array<i64: 1, 4, 8, 8>}, {transform_indices = @transform_5, window_bounds = array<i64: 1, 4, 8, 8>}, {transform_indices = @transform_6, window_bounds = array<i64: 1, 4, 8, 8>}, {transform_indices = @transform_7, window_bounds = array<i64: 1, 4, 8, 8>}]} {
    %c0 = arith.constant 0 : index
    %c0_0 = arith.constant 0 : index
    %c0_1 = arith.constant 0 : index
    %0 = vector.load %arg2[%c0, %c0_0, %c0_1] : memref<1x8x32xf32, #tpu.memory_space<vmem>>, vector<1x8x32xf32>
    %1 = vector.shape_cast %0 : vector<1x8x32xf32> to vector<8x32xf32>
    %2 = tpu.iota {dimensions = array<i32: 0>} : vector<8x1xi32>
    %c8_i32 = arith.constant 8 : i32
    %3 = arith.muli %arg1, %c8_i32 : i32
    %4 = vector.broadcast %3 : i32 to vector<8x1xi32>
    %5 = arith.addi %2, %4 : vector<8x1xi32>
    %c1_i32 = arith.constant 1 : i32
    %6 = vector.broadcast %c1_i32 : i32 to vector<8x1xi32>
    %7 = arith.addi %5, %6 : vector<8x1xi32>
    %8 = arith.sitofp %7 : vector<8x1xi32> to vector<8x1xf32>
    %9 = vector.extract_strided_slice %1 {offsets = [0, 0], sizes = [8, 8], strides = [1, 1]} : vector<8x32xf32> to vector<8x8xf32>
    %c0_2 = arith.constant 0 : index
    %c0_3 = arith.constant 0 : index
    %c0_4 = arith.constant 0 : index
    %10 = vector.load %arg3[%c0_2, %c0_3, %c0_4] : memref<4x8x24xf32, #tpu.memory_space<vmem>>, vector<1x8x24xf32>
    %11 = vector.shape_cast %10 : vector<1x8x24xf32> to vector<8x24xf32>
    %cst = arith.constant dense<0.000000e+00> : vector<8x24xf32>
    %12 = tpu.matmul %9, %11, %cst {dimension_numbers = #tpu.dot_dimension_numbers<[1], [0], [0], [1], [0, 0, 1, 1], [], []>} : vector<8x8xf32>, vector<8x24xf32>, vector<8x24xf32> -> vector<8x24xf32>
    %13 = vector.extract_strided_slice %12 {offsets = [0, 0], sizes = [8, 8], strides = [1, 1]} : vector<8x24xf32> to vector<8x8xf32>
    %14 = vector.extract_strided_slice %12 {offsets = [0, 8], sizes = [8, 8], strides = [1, 1]} : vector<8x24xf32> to vector<8x8xf32>
    %15 = vector.extract_strided_slice %12 {offsets = [0, 16], sizes = [8, 8], strides = [1, 1]} : vector<8x24xf32> to vector<8x8xf32>
    %c0_5 = arith.constant 0 : index
    %c0_6 = arith.constant 0 : index
    %c0_7 = arith.constant 0 : index
    %16 = vector.load %arg4[%c0_5, %c0_6, %c0_7] : memref<4x1x8xf32, #tpu.memory_space<vmem>>, vector<1x1x8xf32>
    %17 = vector.shape_cast %16 : vector<1x1x8xf32> to vector<1x8xf32>
    %18 = vector.broadcast %8 : vector<8x1xf32> to vector<8x8xf32>
    %19 = vector.broadcast %17 : vector<1x8xf32> to vector<8x8xf32>
    %20 = arith.mulf %18, %19 : vector<8x8xf32>
    %21 = math.cos %20 : vector<8x8xf32>
    %22 = math.sin %20 : vector<8x8xf32>
    %23 = arith.mulf %13, %21 : vector<8x8xf32>
    %c0_8 = arith.constant 0 : index
    %c0_9 = arith.constant 0 : index
    %c0_10 = arith.constant 0 : index
    %c0_11 = arith.constant 0 : index
    %24 = vector.load %arg5[%c0_8, %c0_9, %c0_10, %c0_11] : memref<1x4x8x8xf32, #tpu.memory_space<vmem>>, vector<1x1x8x8xf32>
    %25 = vector.shape_cast %24 : vector<1x1x8x8xf32> to vector<8x8xf32>
    %26 = vector.shape_cast %23 : vector<8x8xf32> to vector<1x1x8x8xf32>
    tpu.vector_store %arg5[%c0_8, %c0_9, %c0_10, %c0_11], %26 {strides = array<i32>} : memref<1x4x8x8xf32, #tpu.memory_space<vmem>>, vector<1x1x8x8xf32>,
    %27 = arith.mulf %13, %22 : vector<8x8xf32>
    %c0_12 = arith.constant 0 : index
    %c0_13 = arith.constant 0 : index
    %c0_14 = arith.constant 0 : index
    %c0_15 = arith.constant 0 : index
    %28 = vector.load %arg6[%c0_12, %c0_13, %c0_14, %c0_15] : memref<1x4x8x8xf32, #tpu.memory_space<vmem>>, vector<1x1x8x8xf32>
    %29 = vector.shape_cast %28 : vector<1x1x8x8xf32> to vector<8x8xf32>
    %30 = vector.shape_cast %27 : vector<8x8xf32> to vector<1x1x8x8xf32>
    tpu.vector_store %arg6[%c0_12, %c0_13, %c0_14, %c0_15], %30 {strides = array<i32>} : memref<1x4x8x8xf32, #tpu.memory_space<vmem>>, vector<1x1x8x8xf32>,
    %31 = arith.mulf %14, %21 : vector<8x8xf32>
    %c0_16 = arith.constant 0 : index
    %c0_17 = arith.constant 0 : index
    %c0_18 = arith.constant 0 : index
    %c0_19 = arith.constant 0 : index
    %32 = vector.load %arg7[%c0_16, %c0_17, %c0_18, %c0_19] : memref<1x4x8x8xf32, #tpu.memory_space<vmem>>, vector<1x1x8x8xf32>
    %33 = vector.shape_cast %32 : vector<1x1x8x8xf32> to vector<8x8xf32>
    %34 = vector.shape_cast %31 : vector<8x8xf32> to vector<1x1x8x8xf32>
    tpu.vector_store %arg7[%c0_16, %c0_17, %c0_18, %c0_19], %34 {strides = array<i32>} : memref<1x4x8x8xf32, #tpu.memory_space<vmem>>, vector<1x1x8x8xf32>,
    %35 = arith.mulf %14, %22 : vector<8x8xf32>
    %cst_20 = arith.constant 0.000000e+00 : f32
    %36 = vector.broadcast %cst_20 : f32 to vector<8x8xf32>
    %37 = arith.subf %36, %35 : vector<8x8xf32>
    %c0_21 = arith.constant 0 : index
    %c0_22 = arith.constant 0 : index
    %c0_23 = arith.constant 0 : index
    %c0_24 = arith.constant 0 : index
    %38 = vector.load %arg8[%c0_21, %c0_22, %c0_23, %c0_24] : memref<1x4x8x8xf32, #tpu.memory_space<vmem>>, vector<1x1x8x8xf32>
    %39 = vector.shape_cast %38 : vector<1x1x8x8xf32> to vector<8x8xf32>
    %40 = vector.shape_cast %37 : vector<8x8xf32> to vector<1x1x8x8xf32>
    tpu.vector_store %arg8[%c0_21, %c0_22, %c0_23, %c0_24], %40 {strides = array<i32>} : memref<1x4x8x8xf32, #tpu.memory_space<vmem>>, vector<1x1x8x8xf32>,
    %c0_25 = arith.constant 0 : index
    %c0_26 = arith.constant 0 : index
    %c0_27 = arith.constant 0 : index
    %c0_28 = arith.constant 0 : index
    %41 = vector.load %arg9[%c0_25, %c0_26, %c0_27, %c0_28] : memref<1x4x8x8xf32, #tpu.memory_space<vmem>>, vector<1x1x8x8xf32>
    %42 = vector.shape_cast %41 : vector<1x1x8x8xf32> to vector<8x8xf32>
    %43 = vector.shape_cast %15 : vector<8x8xf32> to vector<1x1x8x8xf32>
    tpu.vector_store %arg9[%c0_25, %c0_26, %c0_27, %c0_28], %43 {strides = array<i32>} : memref<1x4x8x8xf32, #tpu.memory_space<vmem>>, vector<1x1x8x8xf32>,
    %44 = vector.extract_strided_slice %1 {offsets = [0, 8], sizes = [8, 8], strides = [1, 1]} : vector<8x32xf32> to vector<8x8xf32>
    %c1 = arith.constant 1 : index
    %c0_29 = arith.constant 0 : index
    %c0_30 = arith.constant 0 : index
    %45 = vector.load %arg3[%c1, %c0_29, %c0_30] : memref<4x8x24xf32, #tpu.memory_space<vmem>>, vector<1x8x24xf32>
    %46 = vector.shape_cast %45 : vector<1x8x24xf32> to vector<8x24xf32>
    %cst_31 = arith.constant dense<0.000000e+00> : vector<8x24xf32>
    %47 = tpu.matmul %44, %46, %cst_31 {dimension_numbers = #tpu.dot_dimension_numbers<[1], [0], [0], [1], [0, 0, 1, 1], [], []>} : vector<8x8xf32>, vector<8x24xf32>, vector<8x24xf32> -> vector<8x24xf32>
    %48 = vector.extract_strided_slice %47 {offsets = [0, 0], sizes = [8, 8], strides = [1, 1]} : vector<8x24xf32> to vector<8x8xf32>
    %49 = vector.extract_strided_slice %47 {offsets = [0, 8], sizes = [8, 8], strides = [1, 1]} : vector<8x24xf32> to vector<8x8xf32>
    %50 = vector.extract_strided_slice %47 {offsets = [0, 16], sizes = [8, 8], strides = [1, 1]} : vector<8x24xf32> to vector<8x8xf32>
    %c1_32 = arith.constant 1 : index
    %c0_33 = arith.constant 0 : index
    %c0_34 = arith.constant 0 : index
    %51 = vector.load %arg4[%c1_32, %c0_33, %c0_34] : memref<4x1x8xf32, #tpu.memory_space<vmem>>, vector<1x1x8xf32>
    %52 = vector.shape_cast %51 : vector<1x1x8xf32> to vector<1x8xf32>
    %53 = vector.broadcast %8 : vector<8x1xf32> to vector<8x8xf32>
    %54 = vector.broadcast %52 : vector<1x8xf32> to vector<8x8xf32>
    %55 = arith.mulf %53, %54 : vector<8x8xf32>
    %56 = math.cos %55 : vector<8x8xf32>
    %57 = math.sin %55 : vector<8x8xf32>
    %58 = arith.mulf %48, %56 : vector<8x8xf32>
    %c0_35 = arith.constant 0 : index
    %c1_36 = arith.constant 1 : index
    %c0_37 = arith.constant 0 : index
    %c0_38 = arith.constant 0 : index
    %59 = vector.load %arg5[%c0_35, %c1_36, %c0_37, %c0_38] : memref<1x4x8x8xf32, #tpu.memory_space<vmem>>, vector<1x1x8x8xf32>
    %60 = vector.shape_cast %59 : vector<1x1x8x8xf32> to vector<8x8xf32>
    %61 = vector.shape_cast %58 : vector<8x8xf32> to vector<1x1x8x8xf32>
    tpu.vector_store %arg5[%c0_35, %c1_36, %c0_37, %c0_38], %61 {strides = array<i32>} : memref<1x4x8x8xf32, #tpu.memory_space<vmem>>, vector<1x1x8x8xf32>,
    %62 = arith.mulf %48, %57 : vector<8x8xf32>
    %c0_39 = arith.constant 0 : index
    %c1_40 = arith.constant 1 : index
    %c0_41 = arith.constant 0 : index
    %c0_42 = arith.constant 0 : index
    %63 = vector.load %arg6[%c0_39, %c1_40, %c0_41, %c0_42] : memref<1x4x8x8xf32, #tpu.memory_space<vmem>>, vector<1x1x8x8xf32>
    %64 = vector.shape_cast %63 : vector<1x1x8x8xf32> to vector<8x8xf32>
    %65 = vector.shape_cast %62 : vector<8x8xf32> to vector<1x1x8x8xf32>
    tpu.vector_store %arg6[%c0_39, %c1_40, %c0_41, %c0_42], %65 {strides = array<i32>} : memref<1x4x8x8xf32, #tpu.memory_space<vmem>>, vector<1x1x8x8xf32>,
    %66 = arith.mulf %49, %56 : vector<8x8xf32>
    %c0_43 = arith.constant 0 : index
    %c1_44 = arith.constant 1 : index
    %c0_45 = arith.constant 0 : index
    %c0_46 = arith.constant 0 : index
    %67 = vector.load %arg7[%c0_43, %c1_44, %c0_45, %c0_46] : memref<1x4x8x8xf32, #tpu.memory_space<vmem>>, vector<1x1x8x8xf32>
    %68 = vector.shape_cast %67 : vector<1x1x8x8xf32> to vector<8x8xf32>
    %69 = vector.shape_cast %66 : vector<8x8xf32> to vector<1x1x8x8xf32>
    tpu.vector_store %arg7[%c0_43, %c1_44, %c0_45, %c0_46], %69 {strides = array<i32>} : memref<1x4x8x8xf32, #tpu.memory_space<vmem>>, vector<1x1x8x8xf32>,
    %70 = arith.mulf %49, %57 : vector<8x8xf32>
    %cst_47 = arith.constant 0.000000e+00 : f32
    %71 = vector.broadcast %cst_47 : f32 to vector<8x8xf32>
    %72 = arith.subf %71, %70 : vector<8x8xf32>
    %c0_48 = arith.constant 0 : index
    %c1_49 = arith.constant 1 : index
    %c0_50 = arith.constant 0 : index
    %c0_51 = arith.constant 0 : index
    %73 = vector.load %arg8[%c0_48, %c1_49, %c0_50, %c0_51] : memref<1x4x8x8xf32, #tpu.memory_space<vmem>>, vector<1x1x8x8xf32>
    %74 = vector.shape_cast %73 : vector<1x1x8x8xf32> to vector<8x8xf32>
    %75 = vector.shape_cast %72 : vector<8x8xf32> to vector<1x1x8x8xf32>
    tpu.vector_store %arg8[%c0_48, %c1_49, %c0_50, %c0_51], %75 {strides = array<i32>} : memref<1x4x8x8xf32, #tpu.memory_space<vmem>>, vector<1x1x8x8xf32>,
    %c0_52 = arith.constant 0 : index
    %c1_53 = arith.constant 1 : index
    %c0_54 = arith.constant 0 : index
    %c0_55 = arith.constant 0 : index
    %76 = vector.load %arg9[%c0_52, %c1_53, %c0_54, %c0_55] : memref<1x4x8x8xf32, #tpu.memory_space<vmem>>, vector<1x1x8x8xf32>
    %77 = vector.shape_cast %76 : vector<1x1x8x8xf32> to vector<8x8xf32>
    %78 = vector.shape_cast %50 : vector<8x8xf32> to vector<1x1x8x8xf32>
    tpu.vector_store %arg9[%c0_52, %c1_53, %c0_54, %c0_55], %78 {strides = array<i32>} : memref<1x4x8x8xf32, #tpu.memory_space<vmem>>, vector<1x1x8x8xf32>,
    %79 = vector.extract_strided_slice %1 {offsets = [0, 16], sizes = [8, 8], strides = [1, 1]} : vector<8x32xf32> to vector<8x8xf32>
    %c2 = arith.constant 2 : index
    %c0_56 = arith.constant 0 : index
    %c0_57 = arith.constant 0 : index
    %80 = vector.load %arg3[%c2, %c0_56, %c0_57] : memref<4x8x24xf32, #tpu.memory_space<vmem>>, vector<1x8x24xf32>
    %81 = vector.shape_cast %80 : vector<1x8x24xf32> to vector<8x24xf32>
    %cst_58 = arith.constant dense<0.000000e+00> : vector<8x24xf32>
    %82 = tpu.matmul %79, %81, %cst_58 {dimension_numbers = #tpu.dot_dimension_numbers<[1], [0], [0], [1], [0, 0, 1, 1], [], []>} : vector<8x8xf32>, vector<8x24xf32>, vector<8x24xf32> -> vector<8x24xf32>
    %83 = vector.extract_strided_slice %82 {offsets = [0, 0], sizes = [8, 8], strides = [1, 1]} : vector<8x24xf32> to vector<8x8xf32>
    %84 = vector.extract_strided_slice %82 {offsets = [0, 8], sizes = [8, 8], strides = [1, 1]} : vector<8x24xf32> to vector<8x8xf32>
    %85 = vector.extract_strided_slice %82 {offsets = [0, 16], sizes = [8, 8], strides = [1, 1]} : vector<8x24xf32> to vector<8x8xf32>
    %c2_59 = arith.constant 2 : index
    %c0_60 = arith.constant 0 : index
    %c0_61 = arith.constant 0 : index
    %86 = vector.load %arg4[%c2_59, %c0_60, %c0_61] : memref<4x1x8xf32, #tpu.memory_space<vmem>>, vector<1x1x8xf32>
    %87 = vector.shape_cast %86 : vector<1x1x8xf32> to vector<1x8xf32>
    %88 = vector.broadcast %8 : vector<8x1xf32> to vector<8x8xf32>
    %89 = vector.broadcast %87 : vector<1x8xf32> to vector<8x8xf32>
    %90 = arith.mulf %88, %89 : vector<8x8xf32>
    %91 = math.cos %90 : vector<8x8xf32>
    %92 = math.sin %90 : vector<8x8xf32>
    %93 = arith.mulf %83, %91 : vector<8x8xf32>
    %c0_62 = arith.constant 0 : index
    %c2_63 = arith.constant 2 : index
    %c0_64 = arith.constant 0 : index
    %c0_65 = arith.constant 0 : index
    %94 = vector.load %arg5[%c0_62, %c2_63, %c0_64, %c0_65] : memref<1x4x8x8xf32, #tpu.memory_space<vmem>>, vector<1x1x8x8xf32>
    %95 = vector.shape_cast %94 : vector<1x1x8x8xf32> to vector<8x8xf32>
    %96 = vector.shape_cast %93 : vector<8x8xf32> to vector<1x1x8x8xf32>
    tpu.vector_store %arg5[%c0_62, %c2_63, %c0_64, %c0_65], %96 {strides = array<i32>} : memref<1x4x8x8xf32, #tpu.memory_space<vmem>>, vector<1x1x8x8xf32>,
    %97 = arith.mulf %83, %92 : vector<8x8xf32>
    %c0_66 = arith.constant 0 : index
    %c2_67 = arith.constant 2 : index
    %c0_68 = arith.constant 0 : index
    %c0_69 = arith.constant 0 : index
    %98 = vector.load %arg6[%c0_66, %c2_67, %c0_68, %c0_69] : memref<1x4x8x8xf32, #tpu.memory_space<vmem>>, vector<1x1x8x8xf32>
    %99 = vector.shape_cast %98 : vector<1x1x8x8xf32> to vector<8x8xf32>
    %100 = vector.shape_cast %97 : vector<8x8xf32> to vector<1x1x8x8xf32>
    tpu.vector_store %arg6[%c0_66, %c2_67, %c0_68, %c0_69], %100 {strides = array<i32>} : memref<1x4x8x8xf32, #tpu.memory_space<vmem>>, vector<1x1x8x8xf32>,
    %101 = arith.mulf %84, %91 : vector<8x8xf32>
    %c0_70 = arith.constant 0 : index
    %c2_71 = arith.constant 2 : index
    %c0_72 = arith.constant 0 : index
    %c0_73 = arith.constant 0 : index
    %102 = vector.load %arg7[%c0_70, %c2_71, %c0_72, %c0_73] : memref<1x4x8x8xf32, #tpu.memory_space<vmem>>, vector<1x1x8x8xf32>
    %103 = vector.shape_cast %102 : vector<1x1x8x8xf32> to vector<8x8xf32>
    %104 = vector.shape_cast %101 : vector<8x8xf32> to vector<1x1x8x8xf32>
    tpu.vector_store %arg7[%c0_70, %c2_71, %c0_72, %c0_73], %104 {strides = array<i32>} : memref<1x4x8x8xf32, #tpu.memory_space<vmem>>, vector<1x1x8x8xf32>,
    %105 = arith.mulf %84, %92 : vector<8x8xf32>
    %cst_74 = arith.constant 0.000000e+00 : f32
    %106 = vector.broadcast %cst_74 : f32 to vector<8x8xf32>
    %107 = arith.subf %106, %105 : vector<8x8xf32>
    %c0_75 = arith.constant 0 : index
    %c2_76 = arith.constant 2 : index
    %c0_77 = arith.constant 0 : index
    %c0_78 = arith.constant 0 : index
    %108 = vector.load %arg8[%c0_75, %c2_76, %c0_77, %c0_78] : memref<1x4x8x8xf32, #tpu.memory_space<vmem>>, vector<1x1x8x8xf32>
    %109 = vector.shape_cast %108 : vector<1x1x8x8xf32> to vector<8x8xf32>
    %110 = vector.shape_cast %107 : vector<8x8xf32> to vector<1x1x8x8xf32>
    tpu.vector_store %arg8[%c0_75, %c2_76, %c0_77, %c0_78], %110 {strides = array<i32>} : memref<1x4x8x8xf32, #tpu.memory_space<vmem>>, vector<1x1x8x8xf32>,
    %c0_79 = arith.constant 0 : index
    %c2_80 = arith.constant 2 : index
    %c0_81 = arith.constant 0 : index
    %c0_82 = arith.constant 0 : index
    %111 = vector.load %arg9[%c0_79, %c2_80, %c0_81, %c0_82] : memref<1x4x8x8xf32, #tpu.memory_space<vmem>>, vector<1x1x8x8xf32>
    %112 = vector.shape_cast %111 : vector<1x1x8x8xf32> to vector<8x8xf32>
    %113 = vector.shape_cast %85 : vector<8x8xf32> to vector<1x1x8x8xf32>
    tpu.vector_store %arg9[%c0_79, %c2_80, %c0_81, %c0_82], %113 {strides = array<i32>} : memref<1x4x8x8xf32, #tpu.memory_space<vmem>>, vector<1x1x8x8xf32>,
    %114 = vector.extract_strided_slice %1 {offsets = [0, 24], sizes = [8, 8], strides = [1, 1]} : vector<8x32xf32> to vector<8x8xf32>
    %c3 = arith.constant 3 : index
    %c0_83 = arith.constant 0 : index
    %c0_84 = arith.constant 0 : index
    %115 = vector.load %arg3[%c3, %c0_83, %c0_84] : memref<4x8x24xf32, #tpu.memory_space<vmem>>, vector<1x8x24xf32>
    %116 = vector.shape_cast %115 : vector<1x8x24xf32> to vector<8x24xf32>
    %cst_85 = arith.constant dense<0.000000e+00> : vector<8x24xf32>
    %117 = tpu.matmul %114, %116, %cst_85 {dimension_numbers = #tpu.dot_dimension_numbers<[1], [0], [0], [1], [0, 0, 1, 1], [], []>} : vector<8x8xf32>, vector<8x24xf32>, vector<8x24xf32> -> vector<8x24xf32>
    %118 = vector.extract_strided_slice %117 {offsets = [0, 0], sizes = [8, 8], strides = [1, 1]} : vector<8x24xf32> to vector<8x8xf32>
    %119 = vector.extract_strided_slice %117 {offsets = [0, 8], sizes = [8, 8], strides = [1, 1]} : vector<8x24xf32> to vector<8x8xf32>
    %120 = vector.extract_strided_slice %117 {offsets = [0, 16], sizes = [8, 8], strides = [1, 1]} : vector<8x24xf32> to vector<8x8xf32>
    %c3_86 = arith.constant 3 : index
    %c0_87 = arith.constant 0 : index
    %c0_88 = arith.constant 0 : index
    %121 = vector.load %arg4[%c3_86, %c0_87, %c0_88] : memref<4x1x8xf32, #tpu.memory_space<vmem>>, vector<1x1x8xf32>
    %122 = vector.shape_cast %121 : vector<1x1x8xf32> to vector<1x8xf32>
    %123 = vector.broadcast %8 : vector<8x1xf32> to vector<8x8xf32>
    %124 = vector.broadcast %122 : vector<1x8xf32> to vector<8x8xf32>
    %125 = arith.mulf %123, %124 : vector<8x8xf32>
    %126 = math.cos %125 : vector<8x8xf32>
    %127 = math.sin %125 : vector<8x8xf32>
    %128 = arith.mulf %118, %126 : vector<8x8xf32>
    %c0_89 = arith.constant 0 : index
    %c3_90 = arith.constant 3 : index
    %c0_91 = arith.constant 0 : index
    %c0_92 = arith.constant 0 : index
    %129 = vector.load %arg5[%c0_89, %c3_90, %c0_91, %c0_92] : memref<1x4x8x8xf32, #tpu.memory_space<vmem>>, vector<1x1x8x8xf32>
    %130 = vector.shape_cast %129 : vector<1x1x8x8xf32> to vector<8x8xf32>
    %131 = vector.shape_cast %128 : vector<8x8xf32> to vector<1x1x8x8xf32>
    tpu.vector_store %arg5[%c0_89, %c3_90, %c0_91, %c0_92], %131 {strides = array<i32>} : memref<1x4x8x8xf32, #tpu.memory_space<vmem>>, vector<1x1x8x8xf32>,
    %132 = arith.mulf %118, %127 : vector<8x8xf32>
    %c0_93 = arith.constant 0 : index
    %c3_94 = arith.constant 3 : index
    %c0_95 = arith.constant 0 : index
    %c0_96 = arith.constant 0 : index
    %133 = vector.load %arg6[%c0_93, %c3_94, %c0_95, %c0_96] : memref<1x4x8x8xf32, #tpu.memory_space<vmem>>, vector<1x1x8x8xf32>
    %134 = vector.shape_cast %133 : vector<1x1x8x8xf32> to vector<8x8xf32>
    %135 = vector.shape_cast %132 : vector<8x8xf32> to vector<1x1x8x8xf32>
    tpu.vector_store %arg6[%c0_93, %c3_94, %c0_95, %c0_96], %135 {strides = array<i32>} : memref<1x4x8x8xf32, #tpu.memory_space<vmem>>, vector<1x1x8x8xf32>,
    %136 = arith.mulf %119, %126 : vector<8x8xf32>
    %c0_97 = arith.constant 0 : index
    %c3_98 = arith.constant 3 : index
    %c0_99 = arith.constant 0 : index
    %c0_100 = arith.constant 0 : index
    %137 = vector.load %arg7[%c0_97, %c3_98, %c0_99, %c0_100] : memref<1x4x8x8xf32, #tpu.memory_space<vmem>>, vector<1x1x8x8xf32>
    %138 = vector.shape_cast %137 : vector<1x1x8x8xf32> to vector<8x8xf32>
    %139 = vector.shape_cast %136 : vector<8x8xf32> to vector<1x1x8x8xf32>
    tpu.vector_store %arg7[%c0_97, %c3_98, %c0_99, %c0_100], %139 {strides = array<i32>} : memref<1x4x8x8xf32, #tpu.memory_space<vmem>>, vector<1x1x8x8xf32>,
    %140 = arith.mulf %119, %127 : vector<8x8xf32>
    %cst_101 = arith.constant 0.000000e+00 : f32
    %141 = vector.broadcast %cst_101 : f32 to vector<8x8xf32>
    %142 = arith.subf %141, %140 : vector<8x8xf32>
    %c0_102 = arith.constant 0 : index
    %c3_103 = arith.constant 3 : index
    %c0_104 = arith.constant 0 : index
    %c0_105 = arith.constant 0 : index
    %143 = vector.load %arg8[%c0_102, %c3_103, %c0_104, %c0_105] : memref<1x4x8x8xf32, #tpu.memory_space<vmem>>, vector<1x1x8x8xf32>
    %144 = vector.shape_cast %143 : vector<1x1x8x8xf32> to vector<8x8xf32>
    %145 = vector.shape_cast %142 : vector<8x8xf32> to vector<1x1x8x8xf32>
    tpu.vector_store %arg8[%c0_102, %c3_103, %c0_104, %c0_105], %145 {strides = array<i32>} : memref<1x4x8x8xf32, #tpu.memory_space<vmem>>, vector<1x1x8x8xf32>,
    %c0_106 = arith.constant 0 : index
    %c3_107 = arith.constant 3 : index
    %c0_108 = arith.constant 0 : index
    %c0_109 = arith.constant 0 : index
    %146 = vector.load %arg9[%c0_106, %c3_107, %c0_108, %c0_109] : memref<1x4x8x8xf32, #tpu.memory_space<vmem>>, vector<1x1x8x8xf32>
    %147 = vector.shape_cast %146 : vector<1x1x8x8xf32> to vector<8x8xf32>
    %148 = vector.shape_cast %120 : vector<8x8xf32> to vector<1x1x8x8xf32>
    tpu.vector_store %arg9[%c0_106, %c3_107, %c0_108, %c0_109], %148 {strides = array<i32>} : memref<1x4x8x8xf32, #tpu.memory_space<vmem>>, vector<1x1x8x8xf32>,
    return
  }
  func.func @transform_0(%arg0: i32, %arg1: i32) -> (i32, i32, i32) {
    %c0_i32 = arith.constant 0 : i32
    %c0_i32_0 = arith.constant 0 : i32
    return %arg0, %arg1, %c0_i32 : i32, i32, i32
  }
  func.func @transform_1(%arg0: i32, %arg1: i32) -> (i32, i32, i32) {
    %c0_i32 = arith.constant 0 : i32
    %c0_i32_0 = arith.constant 0 : i32
    %c0_i32_1 = arith.constant 0 : i32
    %c0_i32_2 = arith.constant 0 : i32
    return %c0_i32, %c0_i32_0, %c0_i32_1 : i32, i32, i32
  }
  func.func @transform_2(%arg0: i32, %arg1: i32) -> (i32, i32, i32) {
    %c0_i32 = arith.constant 0 : i32
    %c0_i32_0 = arith.constant 0 : i32
    %c0_i32_1 = arith.constant 0 : i32
    %c0_i32_2 = arith.constant 0 : i32
    return %c0_i32, %c0_i32_0, %c0_i32_1 : i32, i32, i32
  }
  func.func @transform_3(%arg0: i32, %arg1: i32) -> (i32, i32, i32, i32) {
    %c0_i32 = arith.constant 0 : i32
    %c0_i32_0 = arith.constant 0 : i32
    %c0_i32_1 = arith.constant 0 : i32
    return %arg0, %c0_i32, %arg1, %c0_i32_0 : i32, i32, i32, i32
  }
  func.func @transform_4(%arg0: i32, %arg1: i32) -> (i32, i32, i32, i32) {
    %c0_i32 = arith.constant 0 : i32
    %c0_i32_0 = arith.constant 0 : i32
    %c0_i32_1 = arith.constant 0 : i32
    return %arg0, %c0_i32, %arg1, %c0_i32_0 : i32, i32, i32, i32
  }
  func.func @transform_5(%arg0: i32, %arg1: i32) -> (i32, i32, i32, i32) {
    %c0_i32 = arith.constant 0 : i32
    %c0_i32_0 = arith.constant 0 : i32
    %c0_i32_1 = arith.constant 0 : i32
    return %arg0, %c0_i32, %arg1, %c0_i32_0 : i32, i32, i32, i32
  }
  func.func @transform_6(%arg0: i32, %arg1: i32) -> (i32, i32, i32, i32) {
    %c0_i32 = arith.constant 0 : i32
    %c0_i32_0 = arith.constant 0 : i32
    %c0_i32_1 = arith.constant 0 : i32
    return %arg0, %c0_i32, %arg1, %c0_i32_0 : i32, i32, i32, i32
  }
  func.func @transform_7(%arg0: i32, %arg1: i32) -> (i32, i32, i32, i32) {
    %c0_i32 = arith.constant 0 : i32
    %c0_i32_0 = arith.constant 0 : i32
    %c0_i32_1 = arith.constant 0 : i32
    return %arg0, %c0_i32, %arg1, %c0_i32_0 : i32, i32, i32, i32
  }
}

</mosaic_0001>

<llo_original>
// kernel: tpu_custom_call.1
$region0: #{tpu_custom_call.1}
  #allocation0 [shape = 'u32[]', space=smem, size = 0x4, offset = 0x4, fixed_abs, tag = 'smem constant byte address 0x4 - core index']
  #allocation1 [shape = 'u32[144,128]{1,0:T(1,128)}', space=vmem, size = 0x12000, scoped, tag = 'internal scratch']
  %s0 = inlined_call_operand.hbm [shape: f32[8,128], index: 0, kind: input, shape index: {}]
  %s1 = inlined_call_operand.hbm [shape: f32[8,128], index: 1, kind: output, shape index: {}]
  %s2 = sld [smem:[#allocation0]]
  $region18: #{tpu_custom_call.1} parent=0
    _
  %s4 = ssub.s32 1, %s2
  %s5 = scalar_select 0, %s4, %s2
  $region1: #{tpu_custom_call.1} parent=0
    #allocation2 [shape = 'u8[4096]{0}', space=vmem, size = 0x1000, scoped, tag = 'input window, operand 0, single buffered']
    #allocation3 [shape = 's32[1]{0}', space=sflag, size = 0x4, scoped, tag = 'scoped memory for tpu_custom_call.1']
    #allocation4 [shape = 's32[1]{0}', space=sflag, size = 0x4, scoped, tag = 'scoped memory for tpu_custom_call.1']
    #allocation5 [shape = 'u8[4096]{0}', space=vmem, size = 0x1000, scoped, tag = 'output window, operand 0, single buffered']
    %6 = vsyncpa [#allocation3], 0
    %7 = vsyncpa [#allocation4], 0
    // Predicated region
    $region2: #{tpu_custom_call.1} parent=1 // pred_check
      _
    $region3: #{tpu_custom_call.1} parent=1 // pred_check_branch
      %9 = sbr.rel (0) target = $region5
    $region4: #{tpu_custom_call.1} parent=1 // pred_region
      %s11 = ssub.s32 128, 128
      %12 = vsyncadd [#allocation3], %s11
      %s14 = sshll.u32 [#allocation2], 4
      %s15 = int_to_ptr.vmem [resolvable:$true] %s14
      %17 = dma.hbm_to_vmem [thread:$0]  %s0, 128, %s15, [#allocation3]
    $region5: #{tpu_custom_call.1} parent=1 // pred_fallthru
      _
    // Predicated region
    $region6: #{tpu_custom_call.1} parent=1 // pred_check
      _
    $region7: #{tpu_custom_call.1} parent=1 // pred_check_branch
      %19 = sbr.rel (0) target = $region9
    $region8: #{tpu_custom_call.1} parent=1 // pred_region
      %20 = dma.done [#allocation3], 128
    $region9: #{tpu_custom_call.1} parent=1 // pred_fallthru
      _
    %v21 = vld [vmem:[#allocation2] sm:$0xff]
    %22 = vst [vmem:[#allocation5] sm:$0xff] %v21
    // Predicated region
    $region10: #{tpu_custom_call.1} parent=1 // pred_check
      _
    $region11: #{tpu_custom_call.1} parent=1 // pred_check_branch
      %24 = sbr.rel (0) target = $region13
    $region12: #{tpu_custom_call.1} parent=1 // pred_region
      %s26 = ssub.s32 128, 128
      %27 = vsyncadd [#allocation4], %s26
      %s29 = sshll.u32 [#allocation5], 4
      %s30 = int_to_ptr.vmem [resolvable:$true] %s29
      %32 = dma.vmem_to_hbm [thread:$0]  %s30, 128, %s1, [#allocation4]
    $region13: #{tpu_custom_call.1} parent=1 // pred_fallthru
      _
    // Predicated region
    $region14: #{tpu_custom_call.1} parent=1 // pred_check
      _
    $region15: #{tpu_custom_call.1} parent=1 // pred_check_branch
      %34 = sbr.rel (0) target = $region17
    $region16: #{tpu_custom_call.1} parent=1 // pred_region
      %35 = dma.done [#allocation4], 128
    $region17: #{tpu_custom_call.1} parent=1 // pred_fallthru
      _
    %36 = vsyncpa [#allocation3], 1
    %37 = vsyncpa [#allocation4], 1

// kernel: tpu_custom_call.1
$region0: #{tpu_custom_call.1}
  #allocation0 [shape = 'u32[]', space=smem, size = 0x4, offset = 0x4, fixed_abs, tag = 'smem constant byte address 0x4 - core index']
  #allocation1 [shape = 'u32[144,128]{1,0:T(1,128)}', space=vmem, size = 0x12000, scoped, tag = 'internal scratch']
  %s0 = inlined_call_operand.hbm [shape: f32[2,8,32], index: 0, kind: input, shape index: {}]
  %s1 = inlined_call_operand.hbm [shape: f32[4,8,24], index: 1, kind: input, shape index: {}]
  %s2 = inlined_call_operand.hbm [shape: f32[4,1,8], index: 2, kind: input, shape index: {}]
  %s3 = inlined_call_operand.hbm [shape: f32[2,4,8,8], index: 3, kind: output, shape index: {0}]
  %s4 = inlined_call_operand.hbm [shape: f32[2,4,8,8], index: 4, kind: output, shape index: {1}]
  %s5 = inlined_call_operand.hbm [shape: f32[2,4,8,8], index: 5, kind: output, shape index: {2}]
  %s6 = inlined_call_operand.hbm [shape: f32[2,4,8,8], index: 6, kind: output, shape index: {3}]
  %s7 = inlined_call_operand.hbm [shape: f32[2,4,8,8], index: 7, kind: output, shape index: {4}]
  %8 = xla_tuple %s3, %s4, %s5, %s6, %s7
  %s9 = sld [smem:[#allocation0]]
  $region89: #{tpu_custom_call.1} parent=0
    _
  %s11 = ssub.s32 1, %s9
  %s12 = scalar_select 0, %s11, %s9
  $region1: #{tpu_custom_call.1} parent=0
    #allocation2 [shape = 'u8[8192]{0}', space=vmem, size = 0x2000, scoped, tag = 'input window, operand 0']
    #allocation3 [shape = 's32[2]{0}', space=sflag, size = 0x8, scoped, tag = 'scoped memory for tpu_custom_call.1']
    #allocation4 [shape = 's32[2]{0}', space=sflag, size = 0x8, scoped, tag = 'scoped memory for tpu_custom_call.1']
    #allocation5 [shape = 'u8[16384]{0}', space=vmem, size = 0x4000, scoped, tag = 'input window, operand 1, single buffered']
    #allocation6 [shape = 's32[1]{0}', space=sflag, size = 0x4, scoped, tag = 'scoped memory for tpu_custom_call.1']
    #allocation7 [shape = 'u8[2048]{0}', space=vmem, size = 0x800, scoped, tag = 'input window, operand 2, single buffered']
    #allocation8 [shape = 'u8[32768]{0}', space=vmem, size = 0x8000, scoped, tag = 'output window, operand 0']
    #allocation9 [shape = 'u8[32768]{0}', space=vmem, size = 0x8000, scoped, tag = 'output window, operand 1']
    #allocation10 [shape = 's32[2]{0}', space=sflag, size = 0x8, scoped, tag = 'scoped memory for tpu_custom_call.1']
    #allocation11 [shape = 'u8[32768]{0}', space=vmem, size = 0x8000, scoped, tag = 'output window, operand 2']
    #allocation12 [shape = 'u8[32768]{0}', space=vmem, size = 0x8000, scoped, tag = 'output window, operand 3']
    #allocation13 [shape = 's32[2]{0}', space=sflag, size = 0x8, scoped, tag = 'scoped memory for tpu_custom_call.1']
    #allocation14 [shape = 'u8[32768]{0}', space=vmem, size = 0x8000, scoped, tag = 'output window, operand 4']
    %13 = vsyncpa [#allocation3], 0
    %s14 = scalar_lea.sflag [#allocation3], 1
    %15 = vsyncpa %s14, 0
    %16 = vsyncpa [#allocation6], 0
    %17 = vsyncpa [#allocation4], 0
    %s18 = scalar_lea.sflag [#allocation4], 1
    %19 = vsyncpa %s18, 0
    %20 = vsyncpa [#allocation10], 0
    %s21 = scalar_lea.sflag [#allocation10], 1
    %22 = vsyncpa %s21, 0
    %23 = vsyncpa [#allocation13], 0
    %s24 = scalar_lea.sflag [#allocation13], 1
    %25 = vsyncpa %s24, 0
    loop: start=0, step=1, limit=4
    $region2: #{tpu_custom_call.1} parent=1 // loop_pre_header
      _
    $region3: #{tpu_custom_call.1} parent=1 // loop_header
      %s27 = sphi 0, %s31
      %p28 = scmp.ge.s32.totalorder %s27, 4
      %s34 = sphi 0, %s46
      %s35 = sphi 0, %s42
      %s36 = sphi 0, %s34
      %s37 = sphi 0, %s35
      %s38 = sphi 0, %s36
      %s39 = sphi 0, %s37
      %s51 = sphi 0, %s53
      %s54 = sphi 0, %s51
      %s55 = sphi 0, %s54
      %s71 = sphi 0, %s55
      %s75 = sphi 0, %s75
      %s77 = sphi 0, %s75
      %s78 = sphi 0, %s77
      %s92 = sphi 0, %s78
      %s96 = sphi 0, %s96
      %s98 = sphi 0, %s96
      %s99 = sphi 0, %s98
      %s113 = sphi 0, %s99
      %s121 = sphi 0, %s123
      %s124 = sphi 0, %s121
      %s125 = sphi 0, %s124
      %s141 = sphi 0, %s125
      %s149 = sphi 0, %s151
      %s152 = sphi 0, %s149
      %s153 = sphi 0, %s152
      %s169 = sphi 0, %s153
      %s177 = sphi 0, %s179
      %s180 = sphi 0, %s177
      %s181 = sphi 0, %s180
      %s197 = sphi 0, %s181
      %s205 = sphi 0, %s207
      %s208 = sphi 0, %s205
      %s209 = sphi 0, %s208
      %s225 = sphi 0, %s209
      %s233 = sphi 0, %s235
      %s236 = sphi 0, %s233
      %s237 = sphi 0, %s236
      %s253 = sphi 0, %s237
    $region4: #{tpu_custom_call.1} parent=1 // loop_header_branch
      %30 = sbr.rel (%p28) target = $region8
    $region5: #{tpu_custom_call.1} parent=1 // loop_body
      %s32 = ssub.s32 %s27, 1
      %s33 = ssub.s32 %s27, 2
      %s40 = sadd.s32 1, %s35
      %p41 = scmp.ge.s32.totalorder %s40, 1
      %s42 = scalar_select %p41, 0, %s40
      %s43 = sadd.s32 1, %s34
      %s44 = scalar_select %p41, %s43, %s34
      %p45 = scmp.ge.s32.totalorder %s44, 2
      %s46 = scalar_select %p45, 0, %s44
      %s47 = ssub.s32 %s34, %s46
      %s48 = ssub.s32 %s35, %s42
      %s49 = sor.u32 %s47, %s48
      %p50 = scmp.eq.s32.totalorder %s49, 0
      %s52 = sadd.s32 %s51, 1
      %s53 = scalar_select %p50, %s51, %s52
      %p56 = pneg %p50
      %p57 = scmp.eq.s32.totalorder %s27, 1
      %p58 = por %p56, %p57
      %p59 = scmp.ne.s32.totalorder %s51, %s54
      %p60 = scmp.eq.s32.totalorder %s27, 0
      %p61 = por %p59, %p60
      %p62 = scmp.ne.s32.totalorder %s51, %s54
      %p63 = scmp.eq.s32.totalorder %s32, 1
      %p64 = por %p62, %p63
      %p65 = scmp.ne.s32.totalorder %s54, %s55
      %p66 = scmp.eq.s32.totalorder %s32, 0
      %p67 = por %p65, %p66
      %p68 = scmp.ne.s32.totalorder %s54, %s55
      %p69 = scmp.eq.s32.totalorder %s33, 1
      %p70 = por %p68, %p69
      %p72 = scmp.ne.s32.totalorder %s55, %s71
      %p73 = scmp.eq.s32.totalorder %s33, 0
      %p74 = por %p72, %p73
      %s76 = sadd.s32 %s75, 1
      %p79 = scmp.eq.s32.totalorder %s27, 1
      %p80 = scmp.ne.s32.totalorder %s75, %s77
      %p81 = scmp.eq.s32.totalorder %s27, 0
      %p82 = por %p80, %p81
      %p83 = scmp.ne.s32.totalorder %s75, %s77
      %p84 = scmp.eq.s32.totalorder %s32, 1
      %p85 = por %p83, %p84
      %p86 = scmp.ne.s32.totalorder %s77, %s78
      %p87 = scmp.eq.s32.totalorder %s32, 0
      %p88 = por %p86, %p87
      %p89 = scmp.ne.s32.totalorder %s77, %s78
      %p90 = scmp.eq.s32.totalorder %s33, 1
      %p91 = por %p89, %p90
      %p93 = scmp.ne.s32.totalorder %s78, %s92
      %p94 = scmp.eq.s32.totalorder %s33, 0
      %p95 = por %p93, %p94
      %s97 = sadd.s32 %s96, 1
      %p100 = scmp.eq.s32.totalorder %s27, 1
      %p101 = scmp.ne.s32.totalorder %s96, %s98
      %p102 = scmp.eq.s32.totalorder %s27, 0
      %p103 = por %p101, %p102
      %p104 = scmp.ne.s32.totalorder %s96, %s98
      %p105 = scmp.eq.s32.totalorder %s32, 1
      %p106 = por %p104, %p105
      %p107 = scmp.ne.s32.totalorder %s98, %s99
      %p108 = scmp.eq.s32.totalorder %s32, 0
      %p109 = por %p107, %p108
      %p110 = scmp.ne.s32.totalorder %s98, %s99
      %p111 = scmp.eq.s32.totalorder %s33, 1
      %p112 = por %p110, %p111
      %p114 = scmp.ne.s32.totalorder %s99, %s113
      %p115 = scmp.eq.s32.totalorder %s33, 0
      %p116 = por %p114, %p115
      %s117 = ssub.s32 %s34, %s46
      %s118 = ssub.s32 %s35, %s42
      %s119 = sor.u32 %s117, %s118
      %p120 = scmp.eq.s32.totalorder %s119, 0
      %s122 = sadd.s32 %s121, 1
      %s123 = scalar_select %p120, %s121, %s122
      %p126 = pneg %p120
      %p127 = scmp.eq.s32.totalorder %s27, 1
      %p128 = por %p126, %p127
      %p129 = scmp.ne.s32.totalorder %s121, %s124
      %p130 = scmp.eq.s32.totalorder %s27, 0
      %p131 = por %p129, %p130
      %p132 = scmp.ne.s32.totalorder %s121, %s124
      %p133 = scmp.eq.s32.totalorder %s32, 1
      %p134 = por %p132, %p133
      %p135 = scmp.ne.s32.totalorder %s124, %s125
      %p136 = scmp.eq.s32.totalorder %s32, 0
      %p137 = por %p135, %p136
      %p138 = scmp.ne.s32.totalorder %s124, %s125
      %p139 = scmp.eq.s32.totalorder %s33, 1
      %p140 = por %p138, %p139
      %p142 = scmp.ne.s32.totalorder %s125, %s141
      %p143 = scmp.eq.s32.totalorder %s33, 0
      %p144 = por %p142, %p143
      %s145 = ssub.s32 %s34, %s46
      %s146 = ssub.s32 %s35, %s42
      %s147 = sor.u32 %s145, %s146
      %p148 = scmp.eq.s32.totalorder %s147, 0
      %s150 = sadd.s32 %s149, 1
      %s151 = scalar_select %p148, %s149, %s150
      %p154 = pneg %p148
      %p155 = scmp.eq.s32.totalorder %s27, 1
      %p156 = por %p154, %p155
      %p157 = scmp.ne.s32.totalorder %s149, %s152
      %p158 = scmp.eq.s32.totalorder %s27, 0
      %p159 = por %p157, %p158
      %p160 = scmp.ne.s32.totalorder %s149, %s152
      %p161 = scmp.eq.s32.totalorder %s32, 1
      %p162 = por %p160, %p161
      %p163 = scmp.ne.s32.totalorder %s152, %s153
      %p164 = scmp.eq.s32.totalorder %s32, 0
      %p165 = por %p163, %p164
      %p166 = scmp.ne.s32.totalorder %s152, %s153
      %p167 = scmp.eq.s32.totalorder %s33, 1
      %p168 = por %p166, %p167
      %p170 = scmp.ne.s32.totalorder %s153, %s169
      %p171 = scmp.eq.s32.totalorder %s33, 0
      %p172 = por %p170, %p171
      %s173 = ssub.s32 %s34, %s46
      %s174 = ssub.s32 %s35, %s42
      %s175 = sor.u32 %s173, %s174
      %p176 = scmp.eq.s32.totalorder %s175, 0
      %s178 = sadd.s32 %s177, 1
      %s179 = scalar_select %p176, %s177, %s178
      %p182 = pneg %p176
      %p183 = scmp.eq.s32.totalorder %s27, 1
      %p184 = por %p182, %p183
      %p185 = scmp.ne.s32.totalorder %s177, %s180
      %p186 = scmp.eq.s32.totalorder %s27, 0
      %p187 = por %p185, %p186
      %p188 = scmp.ne.s32.totalorder %s177, %s180
      %p189 = scmp.eq.s32.totalorder %s32, 1
      %p190 = por %p188, %p189
      %p191 = scmp.ne.s32.totalorder %s180, %s181
      %p192 = scmp.eq.s32.totalorder %s32, 0
      %p193 = por %p191, %p192
      %p194 = scmp.ne.s32.totalorder %s180, %s181
      %p195 = scmp.eq.s32.totalorder %s33, 1
      %p196 = por %p194, %p195
      %p198 = scmp.ne.s32.totalorder %s181, %s197
      %p199 = scmp.eq.s32.totalorder %s33, 0
      %p200 = por %p198, %p199
      %s201 = ssub.s32 %s34, %s46
      %s202 = ssub.s32 %s35, %s42
      %s203 = sor.u32 %s201, %s202
      %p204 = scmp.eq.s32.totalorder %s203, 0
      %s206 = sadd.s32 %s205, 1
      %s207 = scalar_select %p204, %s205, %s206
      %p210 = pneg %p204
      %p211 = scmp.eq.s32.totalorder %s27, 1
      %p212 = por %p210, %p211
      %p213 = scmp.ne.s32.totalorder %s205, %s208
      %p214 = scmp.eq.s32.totalorder %s27, 0
      %p215 = por %p213, %p214
      %p216 = scmp.ne.s32.totalorder %s205, %s208
      %p217 = scmp.eq.s32.totalorder %s32, 1
      %p218 = por %p216, %p217
      %p219 = scmp.ne.s32.totalorder %s208, %s209
      %p220 = scmp.eq.s32.totalorder %s32, 0
      %p221 = por %p219, %p220
      %p222 = scmp.ne.s32.totalorder %s208, %s209
      %p223 = scmp.eq.s32.totalorder %s33, 1
      %p224 = por %p222, %p223
      %p226 = scmp.ne.s32.totalorder %s209, %s225
      %p227 = scmp.eq.s32.totalorder %s33, 0
      %p228 = por %p226, %p227
      %s229 = ssub.s32 %s34, %s46
      %s230 = ssub.s32 %s35, %s42
      %s231 = sor.u32 %s229, %s230
      %p232 = scmp.eq.s32.totalorder %s231, 0
      %s234 = sadd.s32 %s233, 1
      %s235 = scalar_select %p232, %s233, %s234
      %p238 = pneg %p232
      %p239 = scmp.eq.s32.totalorder %s27, 1
      %p240 = por %p238, %p239
      %p241 = scmp.ne.s32.totalorder %s233, %s236
      %p242 = scmp.eq.s32.totalorder %s27, 0
      %p243 = por %p241, %p242
      %p244 = scmp.ne.s32.totalorder %s233, %s236
      %p245 = scmp.eq.s32.totalorder %s32, 1
      %p246 = por %p244, %p245
      %p247 = scmp.ne.s32.totalorder %s236, %s237
      %p248 = scmp.eq.s32.totalorder %s32, 0
      %p249 = por %p247, %p248
      %p250 = scmp.ne.s32.totalorder %s236, %s237
      %p251 = scmp.eq.s32.totalorder %s33, 1
      %p252 = por %p250, %p251
      %p254 = scmp.ne.s32.totalorder %s237, %s253
      %p255 = scmp.eq.s32.totalorder %s33, 0
      %p256 = por %p254, %p255
      %p257 = scmp.le.s32.totalorder 1, %s27
      %p258 = scmp.lt.s32.totalorder %s27, 3
      %p259 = pnand %p257, %p258
      %p260 = pneg %p259
      // Predicated region
      $region9: #{tpu_custom_call.1} parent=5 // pred_check
        _
      $region10: #{tpu_custom_call.1} parent=5 // pred_check_branch
        %262 = sbr.rel (%p259) target = $region12
      $region11: #{tpu_custom_call.1} parent=5 // pred_region
        %s263 = ssub.s32 %s27, 1
        // Predicated region
        $region13: #{tpu_custom_call.1} parent=11 // pred_check
          %p264 = pneg %p88
        $region14: #{tpu_custom_call.1} parent=11 // pred_check_branch
          %266 = sbr.rel (%p264) target = $region16
        $region15: #{tpu_custom_call.1} parent=11 // pred_region
          %s268 = ssub.s32 512, 512
          %269 = vsyncadd [#allocation6], %s268
          %s270 = sshll.u32 [#allocation5], 4
          %s271 = int_to_ptr.vmem [resolvable:$true] %s270
          %276 = dma.hbm_to_vmem [thread:$0]  %s1, 512, %s271, [#allocation6], 128, 128, 8
        $region16: #{tpu_custom_call.1} parent=11 // pred_fallthru
          _
        // Predicated region
        $region17: #{tpu_custom_call.1} parent=11 // pred_check
          %p277 = pneg %p109
        $region18: #{tpu_custom_call.1} parent=11 // pred_check_branch
          %279 = sbr.rel (%p277) target = $region20
        $region19: #{tpu_custom_call.1} parent=11 // pred_region
          %s281 = ssub.s32 64, 64
          %282 = vsyncadd [#allocation6], %s281
          %s283 = sshll.u32 [#allocation7], 4
          %s284 = int_to_ptr.vmem [resolvable:$true] %s283
          %289 = dma.hbm_to_vmem [thread:$0]  %s2, 64, %s284, [#allocation6], 16, 16, 1
        $region20: #{tpu_custom_call.1} parent=11 // pred_fallthru
          _
      $region12: #{tpu_custom_call.1} parent=5 // pred_fallthru
        _
      %p290 = scmp.lt.s32.totalorder %s27, 2
      // Predicated region
      $region21: #{tpu_custom_call.1} parent=5 // pred_check
        %p291 = pneg %p290
      $region22: #{tpu_custom_call.1} parent=5 // pred_check_branch
        %293 = sbr.rel (%p291) target = $region24
      $region23: #{tpu_custom_call.1} parent=5 // pred_region
        // Predicated region
        $region25: #{tpu_custom_call.1} parent=23 // pred_check
          %p294 = pneg %p61
        $region26: #{tpu_custom_call.1} parent=23 // pred_check_branch
          %296 = sbr.rel (%p294) target = $region28
        $region27: #{tpu_custom_call.1} parent=23 // pred_region
          %s297 = sand.u32 %s51, 1
          %s298 = scalar_lea.sflag [#allocation3], %s297
          %s299 = sand.u32 %s51, 1
          %s300 = smul.addr %s299, 8
          %s301 = scalar_lea.vmem [#allocation2], %s300
          %s303 = ssub.s32 128, 128
          %304 = vsyncadd %s298, %s303
          %s305 = sadd.s32 %s35, %s34
          %s306 = smul.addr %s305, 128
          %s307 = scalar_lea.hbm %s0, %s306
          %s309 = sshll.u32 %s301, 4
          %s310 = int_to_ptr.vmem [resolvable:$true] %s309
          %312 = dma.hbm_to_vmem [thread:$0]  %s307, 128, %s310, %s298
        $region28: #{tpu_custom_call.1} parent=23 // pred_fallthru
          _
      $region24: #{tpu_custom_call.1} parent=5 // pred_fallthru
        _
      %p313 = scmp.le.s32.totalorder 1, %s27
      %p314 = scmp.lt.s32.totalorder %s27, 3
      %p315 = pnand %p313, %p314
      %p316 = pneg %p315
      // Predicated region
      $region29: #{tpu_custom_call.1} parent=5 // pred_check
        _
      $region30: #{tpu_custom_call.1} parent=5 // pred_check_branch
        %318 = sbr.rel (%p315) target = $region32
      $region31: #{tpu_custom_call.1} parent=5 // pred_region
        %s319 = ssub.s32 %s27, 1
        %s320 = sand.u32 %s54, 1
        %s321 = scalar_lea.sflag [#allocation3], %s320
        %s322 = sand.u32 %s54, 1
        %s323 = smul.addr %s322, 8
        %s324 = scalar_lea.vmem [#allocation2], %s323
        // Predicated region
        $region33: #{tpu_custom_call.1} parent=31 // pred_check
          %p325 = pneg %p67
        $region34: #{tpu_custom_call.1} parent=31 // pred_check_branch
          %327 = sbr.rel (%p325) target = $region36
        $region35: #{tpu_custom_call.1} parent=31 // pred_region
          %328 = dma.done %s321, 128
        $region36: #{tpu_custom_call.1} parent=31 // pred_fallthru
          _
        // Predicated region
        $region37: #{tpu_custom_call.1} parent=31 // pred_check
          %p329 = pneg %p88
        $region38: #{tpu_custom_call.1} parent=31 // pred_check_branch
          %331 = sbr.rel (%p329) target = $region40
        $region39: #{tpu_custom_call.1} parent=31 // pred_region
          %332 = dma.done [#allocation6], 512
        $region40: #{tpu_custom_call.1} parent=31 // pred_fallthru
          _
        // Predicated region
        $region41: #{tpu_custom_call.1} parent=31 // pred_check
          %p333 = pneg %p109
        $region42: #{tpu_custom_call.1} parent=31 // pred_check_branch
          %335 = sbr.rel (%p333) target = $region44
        $region43: #{tpu_custom_call.1} parent=31 // pred_region
          %336 = dma.done [#allocation6], 64
        $region44: #{tpu_custom_call.1} parent=31 // pred_fallthru
          _
        %s337 = sand.u32 %s54, 1
        %s338 = scalar_lea.sflag [#allocation3], %s337
        %s339 = sand.u32 %s54, 1
        %s340 = smul.addr %s339, 8
        %s341 = scalar_lea.vmem [#allocation2], %s340
        %p342 = pneg %p67
        %p343 = pneg %p64
        %p344 = pneg %p88
        %p345 = pneg %p85
        %p346 = pneg %p109
        %p347 = pneg %p106
        %p348 = pneg %p137
        %p349 = pneg %p134
        %s350 = sand.u32 %s124, 1
        %s351 = scalar_lea.sflag [#allocation4], %s350
        %s352 = sand.u32 %s124, 1
        %s353 = smul.addr %s352, 32
        %s354 = scalar_lea.vmem [#allocation8], %s353
        %p355 = pneg %p165
        %p356 = pneg %p162
        %s357 = sand.u32 %s32, 1
        %s358 = scalar_lea.sflag [#allocation10], %s357
        %s359 = sand.u32 %s152, 1
        %s360 = smul.addr %s359, 32
        %s361 = scalar_lea.vmem [#allocation9], %s360
        %p362 = pneg %p193
        %p363 = pneg %p190
        %s364 = sand.u32 %s32, 1
        %s365 = scalar_lea.sflag [#allocation10], %s364
        %s366 = sand.u32 %s180, 1
        %s367 = smul.addr %s366, 32
        %s368 = scalar_lea.vmem [#allocation11], %s367
        %p369 = pneg %p221
        %p370 = pneg %p218
        %s371 = sand.u32 %s32, 1
        %s372 = scalar_lea.sflag [#allocation13], %s371
        %s373 = sand.u32 %s208, 1
        %s374 = smul.addr %s373, 32
        %s375 = scalar_lea.vmem [#allocation12], %s374
        %p376 = pneg %p249
        %p377 = pneg %p246
        %s378 = sand.u32 %s32, 1
        %s379 = scalar_lea.sflag [#allocation13], %s378
        %s380 = sand.u32 %s236, 1
        %s381 = smul.addr %s380, 32
        %s382 = scalar_lea.vmem [#allocation14], %s381
        %v383 = vld [vmem:[%s324] sm:$0xff]
        %v384 = vlaneseq
        %v385 = vshrl.u32 %v384, 7
        %s386 = smul.u32 %s37, 8
        %v387 = vstv %s386
        %v388 = vadd.s32 %v385, %v387
        %v389 = vadd.s32 %v388, 1
        %v390 = vcvt.s32.f32 %v389
        %v391 = vld [vmem:[#allocation5] sm:$0xff]
        %vm392 = vcmask 64512
        %v394 = vsel %vm392, %v383, 0
        %396 = vmatprep.subr.mxu0 0.0
        %397 = vmatpush1.msra.mxu0 0.0
        %398 = vmatprep.subr.mxu0 0.0
        %399 = vmatpush1.msra.mxu0 0.0
        %400 = vmatprep.subr.mxu0 0.0
        %401 = vmatpush1.msra.mxu0 0.0
        %402 = vmatprep.subr.mxu0 0.0
        %403 = vmatpush1.msra.mxu0 0.0
        %404 = vmatprep.subr.mxu0 0.0
        %405 = vmatpush1.msra.mxu0 0.0
        %406 = vmatprep.subr.mxu0 0.0
        %407 = vmatpush1.msra.mxu0 0.0
        %408 = vmatprep.subr.mxu0 0.0
        %409 = vmatpush1.msra.mxu0 0.0
        %410 = vmatprep.subr.mxu0 0.0
        %411 = vmatpush1.msra.mxu0 0.0
        %412 = vmatprep.subr.mxu0 0.0
        %413 = vmatpush1.msra.mxu0 0.0
        %414 = vmatprep.subr.mxu0 0.0
        %415 = vmatpush1.msra.mxu0 0.0
        %416 = vmatprep.subr.mxu0 0.0
        %417 = vmatpush1.msra.mxu0 0.0
        %418 = vmatprep.subr.mxu0 0.0
        %419 = vmatpush1.msra.mxu0 0.0
        %420 = vmatprep.subr.mxu0 0.0
        %421 = vmatpush1.msra.mxu0 0.0
        %422 = vmatprep.subr.mxu0 0.0
        %423 = vmatpush1.msra.mxu0 0.0
        %424 = vmatprep.subr.mxu0 0.0
        %425 = vmatpush1.msra.mxu0 0.0
        %426 = vmatprep.subr.mxu0 0.0
        %427 = vmatpush1.msra.mxu0 %v391
        %428 = vmatprep.subr.mxu0 0.0
        %429 = vmatpush2.msra.mxu0 0.0
        %430 = vmatprep.subr.mxu0 0.0
        %431 = vmatpush2.msra.mxu0 0.0
        %432 = vmatprep.subr.mxu0 0.0
        %433 = vmatpush2.msra.mxu0 0.0
        %434 = vmatprep.subr.mxu0 0.0
        %435 = vmatpush2.msra.mxu0 0.0
        %436 = vmatprep.subr.mxu0 0.0
        %437 = vmatpush2.msra.mxu0 0.0
        %438 = vmatprep.subr.mxu0 0.0
        %439 = vmatpush2.msra.mxu0 0.0
        %440 = vmatprep.subr.mxu0 0.0
        %441 = vmatpush2.msra.mxu0 0.0
        %442 = vmatprep.subr.mxu0 0.0
        %443 = vmatpush2.msra.mxu0 0.0
        %444 = vmatprep.subr.mxu0 0.0
        %445 = vmatpush2.msra.mxu0 0.0
        %446 = vmatprep.subr.mxu0 0.0
        %447 = vmatpush2.msra.mxu0 0.0
        %448 = vmatprep.subr.mxu0 0.0
        %449 = vmatpush2.msra.mxu0 0.0
        %450 = vmatprep.subr.mxu0 0.0
        %451 = vmatpush2.msra.mxu0 0.0
        %452 = vmatprep.subr.mxu0 0.0
        %453 = vmatpush2.msra.mxu0 0.0
        %454 = vmatprep.subr.mxu0 0.0
        %455 = vmatpush2.msra.mxu0 0.0
        %456 = vmatprep.subr.mxu0 0.0
        %457 = vmatpush2.msra.mxu0 0.0
        %458 = vmatprep.subr.mxu0 0.0
        %459 = vmatpush2.msra.mxu0 0.0
        %460 = vmatprep.mubr.f32.mxu0 0.0
        %461 = vmatmul.mubr.f32.gmra.mxu0 %v394
        %v462 = vpop.f32.mrf.mxu0
        %v463 = vadd.f32 0.0, %v462
        %v464 = vpop.f32.mrf.mxu0
        %465 = vdwg.mxu0
        %v466 = vld [vmem:[#allocation7] sm:$0x1]
        %v468 = vlaneseq
        %v469 = vshrl.u32 %v468, 7
        %v470 = vsub.s32 0, %v469
        %v471 = vrot.slane %v466, %v470
        %v473 = vmul.f32 %v390, %v471
        %v474 = vand.u32 2147483647, %v473
        %vm475 = vcmp.le.f32.partialorder %v474, 0.7853982
        %vm476 = vcmp.lt.s32.totalorder %v473, 0
        %v477 = vand.u32 %v473, 2139095040
        %v478 = vshrl.u32 %v477, 23
        %v479 = vsub.s32 %v478, 127
        %v480 = vand.u32 2147483647, %v473
        %v481 = vand.u32 %v480, 8388607
        %v482 = vor.u32 %v481, 8388608
        %v483 = vsub.s32 0, %v482
        %v484 = vadd.s32 %v479, 1
        %vm485 = vcmp.gt.s32.totalorder %v484, 0
        %v486 = vsel %vm485, %v484, 0
        %v487 = vshrl.u32 %v486, 5
        %v488 = vand.u32 %v486, 31
        %v489 = vsub.s32 32, %v488
        %v490 = vshrl.u32 683565275, %v489
        %v491 = vshll.u32 683565275, %v488
        %v492 = vshrl.u32 2475754826, %v489
        %v493 = vor.u32 %v491, %v492
        %v494 = vshll.u32 2475754826, %v488
        %v495 = vshrl.u32 2131351028, %v489
        %v496 = vor.u32 %v494, %v495
        %v497 = vshll.u32 2131351028, %v488
        %v498 = vshrl.u32 2102212464, %v489
        %v499 = vor.u32 %v497, %v498
        %v500 = vshll.u32 2102212464, %v488
        %v501 = vshrl.u32 920167782, %v489
        %v502 = vor.u32 %v500, %v501
        %v503 = vshll.u32 920167782, %v488
        %v504 = vshrl.u32 1326507024, %v489
        %v505 = vor.u32 %v503, %v504
        %vm506 = vcmp.lt.s32.totalorder %v487, 1
        %vm507 = vcmp.lt.s32.totalorder %v487, 2
        %vm508 = vcmp.lt.s32.totalorder %v487, 3
        %vm509 = vcmp.lt.s32.totalorder %v487, 4
        %v510 = vsel %vm506, %v490, %v493
        %v511 = vsel %vm509, %v499, 2102212464
        %v512 = vsel %vm508, %v496, %v511
        %v513 = vsel %vm507, %v510, %v512
        %v514 = vsel %vm506, %v493, %v496
        %v515 = vsel %vm509, %v502, 920167782
        %v516 = vsel %vm508, %v499, %v515
        %v517 = vsel %vm507, %v514, %v516
        %v518 = vsel %vm506, %v496, %v499
        %v519 = vsel %vm509, %v505, 1326507024
        %v520 = vsel %vm508, %v502, %v519
        %v521 = vsel %vm507, %v518, %v520
        %v522 = vshll.u32 %v482, 8
        %v523 = vmul.u32.u64.compose %v522, %v521
        %v524 = vextract.low.u32 %v523
        %v525 = vextract.high.u32 %v523
        %v526 = vmul.u32.u64.compose %v522, %v517
        %v527 = vextract.low.u32 %v526
        %v528 = vextract.high.u32 %v526
        %v529 = vmul.u32 %v522, %v513
        %v530 = vadd.s32 %v525, %v527
        %vm531 = vc.u32 %v525, %v527
        %v532 = vadd.s32 %v528, 1
        %v533 = vsel %vm531, %v532, %v528
        %v534 = vadd.s32 %v529, %v533
        %v535 = vadd.s32 %v534, 536870912
        %v536 = vshrl.u32 %v535, 30
        %v537 = vshll.u32 %v536, 30
        %v538 = vsub.s32 %v534, %v537
        %vm539 = vcmp.lt.s32.totalorder %v538, 0
        %v540 = vsub.s32 0, %v538
        %v541 = vsel %vm539, %v540, %v538
        %v542 = vclz %v541
        %v543 = vsub.s32 %v542, 2
        %vm544 = vcmp.gt.s32.totalorder 0, %v543
        %v545 = vsel %vm544, 0, %v543
        %v546 = vsub.s32 32, %v545
        %v547 = vshll.u32 %v538, %v545
        %v548 = vshrl.u32 %v530, %v546
        %v549 = vor.u32 %v547, %v548
        %v550 = vsub.s32 4294967266, %v545
        %v551 = vadd.s32 %v550, 127
        %v552 = vshll.u32 %v551, 23
        %v553 = vor.u32 4788187, %v552
        %v554 = vand.u32 2147483647, %v553
        %v556 = vcvt.s32.f32 %v549
        %v557 = vmul.f32 %v556, %v554
        %v558 = vxor.u32 %v557, 2147483648
        %v559 = vsel %vm476, %v558, %v557
        %v560 = vsub.s32 4, %v536
        %v561 = vsel %vm476, %v560, %v536
        %v562 = vsel %vm475, %v473, %v559
        %v563 = vsel %vm475, 0, %v561
        %v564 = vcosq.f32.pop %v562
        %v565 = vsinq.f32.pop %v562
        %vm566 = vweird.f32 %v473
        %v567 = vand.u32 %v563, 3
        %vm568 = vcmp.lt.s32.totalorder %v567, 2
        %vm569 = vcmp.eq.s32.totalorder %v567, 0
        %v570 = vxor.u32 %v565, 2147483648
        %v571 = vsel %vm569, %v564, %v570
        %vm572 = vcmp.eq.s32.totalorder %v567, 2
        %v573 = vxor.u32 %v564, 2147483648
        %v574 = vsel %vm572, %v573, %v565
        %v575 = vsel %vm568, %v571, %v574
        %v576 = vsel %vm566, nan, %v575
        %v577 = vand.u32 2147483647, %v473
        %vm578 = vcmp.le.f32.partialorder %v577, 0.7853982
        %vm579 = vcmp.lt.s32.totalorder %v473, 0
        %v580 = vand.u32 %v473, 2139095040
        %v581 = vshrl.u32 %v580, 23
        %v582 = vsub.s32 %v581, 127
        %v583 = vand.u32 2147483647, %v473
        %v584 = vand.u32 %v583, 8388607
        %v585 = vor.u32 %v584, 8388608
        %v586 = vsub.s32 0, %v585
        %v587 = vadd.s32 %v582, 1
        %vm588 = vcmp.gt.s32.totalorder %v587, 0
        %v589 = vsel %vm588, %v587, 0
        %v590 = vshrl.u32 %v589, 5
        %v591 = vand.u32 %v589, 31
        %v592 = vsub.s32 32, %v591
        %v593 = vshrl.u32 683565275, %v592
        %v594 = vshll.u32 683565275, %v591
        %v595 = vshrl.u32 2475754826, %v592
        %v596 = vor.u32 %v594, %v595
        %v597 = vshll.u32 2475754826, %v591
        %v598 = vshrl.u32 2131351028, %v592
        %v599 = vor.u32 %v597, %v598
        %v600 = vshll.u32 2131351028, %v591
        %v601 = vshrl.u32 2102212464, %v592
        %v602 = vor.u32 %v600, %v601
        %v603 = vshll.u32 2102212464, %v591
        %v604 = vshrl.u32 920167782, %v592
        %v605 = vor.u32 %v603, %v604
        %v606 = vshll.u32 920167782, %v591
        %v607 = vshrl.u32 1326507024, %v592
        %v608 = vor.u32 %v606, %v607
        %vm609 = vcmp.lt.s32.totalorder %v590, 1
        %vm610 = vcmp.lt.s32.totalorder %v590, 2
        %vm611 = vcmp.lt.s32.totalorder %v590, 3
        %vm612 = vcmp.lt.s32.totalorder %v590, 4
        %v613 = vsel %vm609, %v593, %v596
        %v614 = vsel %vm612, %v602, 2102212464
        %v615 = vsel %vm611, %v599, %v614
        %v616 = vsel %vm610, %v613, %v615
        %v617 = vsel %vm609, %v596, %v599
        %v618 = vsel %vm612, %v605, 920167782
        %v619 = vsel %vm611, %v602, %v618
        %v620 = vsel %vm610, %v617, %v619
        %v621 = vsel %vm609, %v599, %v602
        %v622 = vsel %vm612, %v608, 1326507024
        %v623 = vsel %vm611, %v605, %v622
        %v624 = vsel %vm610, %v621, %v623
        %v625 = vshll.u32 %v585, 8
        %v626 = vmul.u32.u64.compose %v625, %v624
        %v627 = vextract.low.u32 %v626
        %v628 = vextract.high.u32 %v626
        %v629 = vmul.u32.u64.compose %v625, %v620
        %v630 = vextract.low.u32 %v629
        %v631 = vextract.high.u32 %v629
        %v632 = vmul.u32 %v625, %v616
        %v633 = vadd.s32 %v628, %v630
        %vm634 = vc.u32 %v628, %v630
        %v635 = vadd.s32 %v631, 1
        %v636 = vsel %vm634, %v635, %v631
        %v637 = vadd.s32 %v632, %v636
        %v638 = vadd.s32 %v637, 536870912
        %v639 = vshrl.u32 %v638, 30
        %v640 = vshll.u32 %v639, 30
        %v641 = vsub.s32 %v637, %v640
        %vm642 = vcmp.lt.s32.totalorder %v641, 0
        %v643 = vsub.s32 0, %v641
        %v644 = vsel %vm642, %v643, %v641
        %v645 = vclz %v644
        %v646 = vsub.s32 %v645, 2
        %vm647 = vcmp.gt.s32.totalorder 0, %v646
        %v648 = vsel %vm647, 0, %v646
        %v649 = vsub.s32 32, %v648
        %v650 = vshll.u32 %v641, %v648
        %v651 = vshrl.u32 %v633, %v649
        %v652 = vor.u32 %v650, %v651
        %v653 = vsub.s32 4294967266, %v648
        %v654 = vadd.s32 %v653, 127
        %v655 = vshll.u32 %v654, 23
        %v656 = vor.u32 4788187, %v655
        %v657 = vand.u32 2147483647, %v656
        %v659 = vcvt.s32.f32 %v652
        %v660 = vmul.f32 %v659, %v657
        %v661 = vxor.u32 %v660, 2147483648
        %v662 = vsel %vm579, %v661, %v660
        %v663 = vsub.s32 4, %v639
        %v664 = vsel %vm579, %v663, %v639
        %v665 = vsel %vm578, %v473, %v662
        %v666 = vsel %vm578, 0, %v664
        %v667 = vcosq.f32.pop %v665
        %v668 = vsinq.f32.pop %v665
        %vm669 = vweird.f32 %v473
        %v670 = vadd.s32 %v666, 3
        %v671 = vand.u32 %v670, 3
        %vm672 = vcmp.lt.s32.totalorder %v671, 2
        %vm673 = vcmp.eq.s32.totalorder %v671, 0
        %v674 = vxor.u32 %v668, 2147483648
        %v675 = vsel %vm673, %v667, %v674
        %vm676 = vcmp.eq.s32.totalorder %v671, 2
        %v677 = vxor.u32 %v667, 2147483648
        %v678 = vsel %vm676, %v677, %v668
        %v679 = vsel %vm672, %v675, %v678
        %v680 = vsel %vm669, nan, %v679
        %v681 = vmul.f32 %v463, %v576
        %682 = vst.msk [vmem:[%s354] sm:$0xff] %vm392, %v681
        %v683 = vmul.f32 %v463, %v680
        %684 = vst.msk [vmem:[%s361] sm:$0xff] %vm392, %v683
        %686 = vrot.lane.b32.xlu0 %v576, 8
        %v687 = vpop.permute.xlu0 %686
        %v689 = vmul.f32 %v463, %v687
        %691 = vrot.lane.b32.xlu0 %v689, 120
        %v692 = vpop.permute.xlu0 %691
        %694 = vst.msk [vmem:[%s368] sm:$0xff] %vm392, %v692
        %696 = vrot.lane.b32.xlu0 %v680, 8
        %v697 = vpop.permute.xlu0 %696
        %v699 = vmul.f32 %v463, %v697
        %v700 = vsub.f32 0.0, %v699
        %702 = vrot.lane.b32.xlu0 %v700, 120
        %v703 = vpop.permute.xlu0 %702
        %705 = vst.msk [vmem:[%s375] sm:$0xff] %vm392, %v703
        %707 = vrot.lane.b32.xlu0 %v463, 112
        %v708 = vpop.permute.xlu0 %707
        %710 = vst.msk [vmem:[%s382] sm:$0xff] %vm392, %v708
        %s711 = scalar_lea.vmem [#allocation5], 8
        %v712 = vld [vmem:[%s711] sm:$0xff]
        %713 = vrot.lane.b32.xlu0 %v383, 120
        %v714 = vpop.permute.xlu0 %713
        %v715 = vsel %vm392, %v714, 0
        %717 = vmatprep.subr.mxu0 0.0
        %718 = vmatpush1.msra.mxu0 0.0
        %719 = vmatprep.subr.mxu0 0.0
        %720 = vmatpush1.msra.mxu0 0.0
        %721 = vmatprep.subr.mxu0 0.0
        %722 = vmatpush1.msra.mxu0 0.0
        %723 = vmatprep.subr.mxu0 0.0
        %724 = vmatpush1.msra.mxu0 0.0
        %725 = vmatprep.subr.mxu0 0.0
        %726 = vmatpush1.msra.mxu0 0.0
        %727 = vmatprep.subr.mxu0 0.0
        %728 = vmatpush1.msra.mxu0 0.0
        %729 = vmatprep.subr.mxu0 0.0
        %730 = vmatpush1.msra.mxu0 0.0
        %731 = vmatprep.subr.mxu0 0.0
        %732 = vmatpush1.msra.mxu0 0.0
        %733 = vmatprep.subr.mxu0 0.0
        %734 = vmatpush1.msra.mxu0 0.0
        %735 = vmatprep.subr.mxu0 0.0
        %736 = vmatpush1.msra.mxu0 0.0
        %737 = vmatprep.subr.mxu0 0.0
        %738 = vmatpush1.msra.mxu0 0.0
        %739 = vmatprep.subr.mxu0 0.0
        %740 = vmatpush1.msra.mxu0 0.0
        %741 = vmatprep.subr.mxu0 0.0
        %742 = vmatpush1.msra.mxu0 0.0
        %743 = vmatprep.subr.mxu0 0.0
        %744 = vmatpush1.msra.mxu0 0.0
        %745 = vmatprep.subr.mxu0 0.0
        %746 = vmatpush1.msra.mxu0 0.0
        %747 = vmatprep.subr.mxu0 0.0
        %748 = vmatpush1.msra.mxu0 %v712
        %749 = vmatprep.subr.mxu0 0.0
        %750 = vmatpush2.msra.mxu0 0.0
        %751 = vmatprep.subr.mxu0 0.0
        %752 = vmatpush2.msra.mxu0 0.0
        %753 = vmatprep.subr.mxu0 0.0
        %754 = vmatpush2.msra.mxu0 0.0
        %755 = vmatprep.subr.mxu0 0.0
        %756 = vmatpush2.msra.mxu0 0.0
        %757 = vmatprep.subr.mxu0 0.0
        %758 = vmatpush2.msra.mxu0 0.0
        %759 = vmatprep.subr.mxu0 0.0
        %760 = vmatpush2.msra.mxu0 0.0
        %761 = vmatprep.subr.mxu0 0.0
        %762 = vmatpush2.msra.mxu0 0.0
        %763 = vmatprep.subr.mxu0 0.0
        %764 = vmatpush2.msra.mxu0 0.0
        %765 = vmatprep.subr.mxu0 0.0
        %766 = vmatpush2.msra.mxu0 0.0
        %767 = vmatprep.subr.mxu0 0.0
        %768 = vmatpush2.msra.mxu0 0.0
        %769 = vmatprep.subr.mxu0 0.0
        %770 = vmatpush2.msra.mxu0 0.0
        %771 = vmatprep.subr.mxu0 0.0
        %772 = vmatpush2.msra.mxu0 0.0
        %773 = vmatprep.subr.mxu0 0.0
        %774 = vmatpush2.msra.mxu0 0.0
        %775 = vmatprep.subr.mxu0 0.0
        %776 = vmatpush2.msra.mxu0 0.0
        %777 = vmatprep.subr.mxu0 0.0
        %778 = vmatpush2.msra.mxu0 0.0
        %779 = vmatprep.subr.mxu0 0.0
        %780 = vmatpush2.msra.mxu0 0.0
        %781 = vmatprep.mubr.f32.mxu0 0.0
        %782 = vmatmul.mubr.f32.gmra.mxu0 %v715
        %v783 = vpop.f32.mrf.mxu0
        %v784 = vadd.f32 0.0, %v783
        %v785 = vpop.f32.mrf.mxu0
        %786 = vdwg.mxu0
        %s787 = scalar_lea.vmem [#allocation7], 1
        %v788 = vld [vmem:[%s787] sm:$0x1]
        %v790 = vlaneseq
        %v791 = vshrl.u32 %v790, 7
        %v792 = vsub.s32 0, %v791
        %v793 = vrot.slane %v788, %v792
        %v795 = vmul.f32 %v390, %v793
        %v796 = vand.u32 2147483647, %v795
        %vm797 = vcmp.le.f32.partialorder %v796, 0.7853982
        %vm798 = vcmp.lt.s32.totalorder %v795, 0
        %v799 = vand.u32 %v795, 2139095040
        %v800 = vshrl.u32 %v799, 23
        %v801 = vsub.s32 %v800, 127
        %v802 = vand.u32 2147483647, %v795
        %v803 = vand.u32 %v802, 8388607
        %v804 = vor.u32 %v803, 8388608
        %v805 = vsub.s32 0, %v804
        %v806 = vadd.s32 %v801, 1
        %vm807 = vcmp.gt.s32.totalorder %v806, 0
        %v808 = vsel %vm807, %v806, 0
        %v809 = vshrl.u32 %v808, 5
        %v810 = vand.u32 %v808, 31
        %v811 = vsub.s32 32, %v810
        %v812 = vshrl.u32 683565275, %v811
        %v813 = vshll.u32 683565275, %v810
        %v814 = vshrl.u32 2475754826, %v811
        %v815 = vor.u32 %v813, %v814
        %v816 = vshll.u32 2475754826, %v810
        %v817 = vshrl.u32 2131351028, %v811
        %v818 = vor.u32 %v816, %v817
        %v819 = vshll.u32 2131351028, %v810
        %v820 = vshrl.u32 2102212464, %v811
        %v821 = vor.u32 %v819, %v820
        %v822 = vshll.u32 2102212464, %v810
        %v823 = vshrl.u32 920167782, %v811
        %v824 = vor.u32 %v822, %v823
        %v825 = vshll.u32 920167782, %v810
        %v826 = vshrl.u32 1326507024, %v811
        %v827 = vor.u32 %v825, %v826
        %vm828 = vcmp.lt.s32.totalorder %v809, 1
        %vm829 = vcmp.lt.s32.totalorder %v809, 2
        %vm830 = vcmp.lt.s32.totalorder %v809, 3
        %vm831 = vcmp.lt.s32.totalorder %v809, 4
        %v832 = vsel %vm828, %v812, %v815
        %v833 = vsel %vm831, %v821, 2102212464
        %v834 = vsel %vm830, %v818, %v833
        %v835 = vsel %vm829, %v832, %v834
        %v836 = vsel %vm828, %v815, %v818
        %v837 = vsel %vm831, %v824, 920167782
        %v838 = vsel %vm830, %v821, %v837
        %v839 = vsel %vm829, %v836, %v838
        %v840 = vsel %vm828, %v818, %v821
        %v841 = vsel %vm831, %v827, 1326507024
        %v842 = vsel %vm830, %v824, %v841
        %v843 = vsel %vm829, %v840, %v842
        %v844 = vshll.u32 %v804, 8
        %v845 = vmul.u32.u64.compose %v844, %v843
        %v846 = vextract.low.u32 %v845
        %v847 = vextract.high.u32 %v845
        %v848 = vmul.u32.u64.compose %v844, %v839
        %v849 = vextract.low.u32 %v848
        %v850 = vextract.high.u32 %v848
        %v851 = vmul.u32 %v844, %v835
        %v852 = vadd.s32 %v847, %v849
        %vm853 = vc.u32 %v847, %v849
        %v854 = vadd.s32 %v850, 1
        %v855 = vsel %vm853, %v854, %v850
        %v856 = vadd.s32 %v851, %v855
        %v857 = vadd.s32 %v856, 536870912
        %v858 = vshrl.u32 %v857, 30
        %v859 = vshll.u32 %v858, 30
        %v860 = vsub.s32 %v856, %v859
        %vm861 = vcmp.lt.s32.totalorder %v860, 0
        %v862 = vsub.s32 0, %v860
        %v863 = vsel %vm861, %v862, %v860
        %v864 = vclz %v863
        %v865 = vsub.s32 %v864, 2
        %vm866 = vcmp.gt.s32.totalorder 0, %v865
        %v867 = vsel %vm866, 0, %v865
        %v868 = vsub.s32 32, %v867
        %v869 = vshll.u32 %v860, %v867
        %v870 = vshrl.u32 %v852, %v868
        %v871 = vor.u32 %v869, %v870
        %v872 = vsub.s32 4294967266, %v867
        %v873 = vadd.s32 %v872, 127
        %v874 = vshll.u32 %v873, 23
        %v875 = vor.u32 4788187, %v874
        %v876 = vand.u32 2147483647, %v875
        %v878 = vcvt.s32.f32 %v871
        %v879 = vmul.f32 %v878, %v876
        %v880 = vxor.u32 %v879, 2147483648
        %v881 = vsel %vm798, %v880, %v879
        %v882 = vsub.s32 4, %v858
        %v883 = vsel %vm798, %v882, %v858
        %v884 = vsel %vm797, %v795, %v881
        %v885 = vsel %vm797, 0, %v883
        %v886 = vcosq.f32.pop %v884
        %v887 = vsinq.f32.pop %v884
        %vm888 = vweird.f32 %v795
        %v889 = vand.u32 %v885, 3
        %vm890 = vcmp.lt.s32.totalorder %v889, 2
        %vm891 = vcmp.eq.s32.totalorder %v889, 0
        %v892 = vxor.u32 %v887, 2147483648
        %v893 = vsel %vm891, %v886, %v892
        %vm894 = vcmp.eq.s32.totalorder %v889, 2
        %v895 = vxor.u32 %v886, 2147483648
        %v896 = vsel %vm894, %v895, %v887
        %v897 = vsel %vm890, %v893, %v896
        %v898 = vsel %vm888, nan, %v897
        %v899 = vand.u32 2147483647, %v795
        %vm900 = vcmp.le.f32.partialorder %v899, 0.7853982
        %vm901 = vcmp.lt.s32.totalorder %v795, 0
        %v902 = vand.u32 %v795, 2139095040
        %v903 = vshrl.u32 %v902, 23
        %v904 = vsub.s32 %v903, 127
        %v905 = vand.u32 2147483647, %v795
        %v906 = vand.u32 %v905, 8388607
        %v907 = vor.u32 %v906, 8388608
        %v908 = vsub.s32 0, %v907
        %v909 = vadd.s32 %v904, 1
        %vm910 = vcmp.gt.s32.totalorder %v909, 0
        %v911 = vsel %vm910, %v909, 0
        %v912 = vshrl.u32 %v911, 5
        %v913 = vand.u32 %v911, 31
        %v914 = vsub.s32 32, %v913
        %v915 = vshrl.u32 683565275, %v914
        %v916 = vshll.u32 683565275, %v913
        %v917 = vshrl.u32 2475754826, %v914
        %v918 = vor.u32 %v916, %v917
        %v919 = vshll.u32 2475754826, %v913
        %v920 = vshrl.u32 2131351028, %v914
        %v921 = vor.u32 %v919, %v920
        %v922 = vshll.u32 2131351028, %v913
        %v923 = vshrl.u32 2102212464, %v914
        %v924 = vor.u32 %v922, %v923
        %v925 = vshll.u32 2102212464, %v913
        %v926 = vshrl.u32 920167782, %v914
        %v927 = vor.u32 %v925, %v926
        %v928 = vshll.u32 920167782, %v913
        %v929 = vshrl.u32 1326507024, %v914
        %v930 = vor.u32 %v928, %v929
        %vm931 = vcmp.lt.s32.totalorder %v912, 1
        %vm932 = vcmp.lt.s32.totalorder %v912, 2
        %vm933 = vcmp.lt.s32.totalorder %v912, 3
        %vm934 = vcmp.lt.s32.totalorder %v912, 4
        %v935 = vsel %vm931, %v915, %v918
        %v936 = vsel %vm934, %v924, 2102212464
        %v937 = vsel %vm933, %v921, %v936
        %v938 = vsel %vm932, %v935, %v937
        %v939 = vsel %vm931, %v918, %v921
        %v940 = vsel %vm934, %v927, 920167782
        %v941 = vsel %vm933, %v924, %v940
        %v942 = vsel %vm932, %v939, %v941
        %v943 = vsel %vm931, %v921, %v924
        %v944 = vsel %vm934, %v930, 1326507024
        %v945 = vsel %vm933, %v927, %v944
        %v946 = vsel %vm932, %v943, %v945
        %v947 = vshll.u32 %v907, 8
        %v948 = vmul.u32.u64.compose %v947, %v946
        %v949 = vextract.low.u32 %v948
        %v950 = vextract.high.u32 %v948
        %v951 = vmul.u32.u64.compose %v947, %v942
        %v952 = vextract.low.u32 %v951
        %v953 = vextract.high.u32 %v951
        %v954 = vmul.u32 %v947, %v938
        %v955 = vadd.s32 %v950, %v952
        %vm956 = vc.u32 %v950, %v952
        %v957 = vadd.s32 %v953, 1
        %v958 = vsel %vm956, %v957, %v953
        %v959 = vadd.s32 %v954, %v958
        %v960 = vadd.s32 %v959, 536870912
        %v961 = vshrl.u32 %v960, 30
        %v962 = vshll.u32 %v961, 30
        %v963 = vsub.s32 %v959, %v962
        %vm964 = vcmp.lt.s32.totalorder %v963, 0
        %v965 = vsub.s32 0, %v963
        %v966 = vsel %vm964, %v965, %v963
        %v967 = vclz %v966
        %v968 = vsub.s32 %v967, 2
        %vm969 = vcmp.gt.s32.totalorder 0, %v968
        %v970 = vsel %vm969, 0, %v968
        %v971 = vsub.s32 32, %v970
        %v972 = vshll.u32 %v963, %v970
        %v973 = vshrl.u32 %v955, %v971
        %v974 = vor.u32 %v972, %v973
        %v975 = vsub.s32 4294967266, %v970
        %v976 = vadd.s32 %v975, 127
        %v977 = vshll.u32 %v976, 23
        %v978 = vor.u32 4788187, %v977
        %v979 = vand.u32 2147483647, %v978
        %v981 = vcvt.s32.f32 %v974
        %v982 = vmul.f32 %v981, %v979
        %v983 = vxor.u32 %v982, 2147483648
        %v984 = vsel %vm901, %v983, %v982
        %v985 = vsub.s32 4, %v961
        %v986 = vsel %vm901, %v985, %v961
        %v987 = vsel %vm900, %v795, %v984
        %v988 = vsel %vm900, 0, %v986
        %v989 = vcosq.f32.pop %v987
        %v990 = vsinq.f32.pop %v987
        %vm991 = vweird.f32 %v795
        %v992 = vadd.s32 %v988, 3
        %v993 = vand.u32 %v992, 3
        %vm994 = vcmp.lt.s32.totalorder %v993, 2
        %vm995 = vcmp.eq.s32.totalorder %v993, 0
        %v996 = vxor.u32 %v990, 2147483648
        %v997 = vsel %vm995, %v989, %v996
        %vm998 = vcmp.eq.s32.totalorder %v993, 2
        %v999 = vxor.u32 %v989, 2147483648
        %v1000 = vsel %vm998, %v999, %v990
        %v1001 = vsel %vm994, %v997, %v1000
        %v1002 = vsel %vm991, nan, %v1001
        %v1003 = vmul.f32 %v784, %v898
        %s1004 = scalar_lea.vmem %s354, 8 [#allocation8]
        %1005 = vst.msk [vmem:[%s1004] sm:$0xff] %vm392, %v1003
        %v1006 = vmul.f32 %v784, %v1002
        %s1007 = scalar_lea.vmem %s361, 8 [#allocation9]
        %1008 = vst.msk [vmem:[%s1007] sm:$0xff] %vm392, %v1006
        %1010 = vrot.lane.b32.xlu0 %v898, 8
        %v1011 = vpop.permute.xlu0 %1010
        %v1013 = vmul.f32 %v784, %v1011
        %1015 = vrot.lane.b32.xlu0 %v1013, 120
        %v1016 = vpop.permute.xlu0 %1015
        %s1018 = scalar_lea.vmem %s368, 8 [#allocation11]
        %1019 = vst.msk [vmem:[%s1018] sm:$0xff] %vm392, %v1016
        %1021 = vrot.lane.b32.xlu0 %v1002, 8
        %v1022 = vpop.permute.xlu0 %1021
        %v1024 = vmul.f32 %v784, %v1022
        %v1025 = vsub.f32 0.0, %v1024
        %1027 = vrot.lane.b32.xlu0 %v1025, 120
        %v1028 = vpop.permute.xlu0 %1027
        %s1030 = scalar_lea.vmem %s375, 8 [#allocation12]
        %1031 = vst.msk [vmem:[%s1030] sm:$0xff] %vm392, %v1028
        %1033 = vrot.lane.b32.xlu0 %v784, 112
        %v1034 = vpop.permute.xlu0 %1033
        %s1036 = scalar_lea.vmem %s382, 8 [#allocation14]
        %1037 = vst.msk [vmem:[%s1036] sm:$0xff] %vm392, %v1034
        %s1038 = scalar_lea.vmem [#allocation5], 16
        %v1039 = vld [vmem:[%s1038] sm:$0xff]
        %1040 = vrot.lane.b32.xlu0 %v383, 112
        %v1041 = vpop.permute.xlu0 %1040
        %v1042 = vsel %vm392, %v1041, 0
        %1044 = vmatprep.subr.mxu0 0.0
        %1045 = vmatpush1.msra.mxu0 0.0
        %1046 = vmatprep.subr.mxu0 0.0
        %1047 = vmatpush1.msra.mxu0 0.0
        %1048 = vmatprep.subr.mxu0 0.0
        %1049 = vmatpush1.msra.mxu0 0.0
        %1050 = vmatprep.subr.mxu0 0.0
        %1051 = vmatpush1.msra.mxu0 0.0
        %1052 = vmatprep.subr.mxu0 0.0
        %1053 = vmatpush1.msra.mxu0 0.0
        %1054 = vmatprep.subr.mxu0 0.0
        %1055 = vmatpush1.msra.mxu0 0.0
        %1056 = vmatprep.subr.mxu0 0.0
        %1057 = vmatpush1.msra.mxu0 0.0
        %1058 = vmatprep.subr.mxu0 0.0
        %1059 = vmatpush1.msra.mxu0 0.0
        %1060 = vmatprep.subr.mxu0 0.0
        %1061 = vmatpush1.msra.mxu0 0.0
        %1062 = vmatprep.subr.mxu0 0.0
        %1063 = vmatpush1.msra.mxu0 0.0
        %1064 = vmatprep.subr.mxu0 0.0
        %1065 = vmatpush1.msra.mxu0 0.0
        %1066 = vmatprep.subr.mxu0 0.0
        %1067 = vmatpush1.msra.mxu0 0.0
        %1068 = vmatprep.subr.mxu0 0.0
        %1069 = vmatpush1.msra.mxu0 0.0
        %1070 = vmatprep.subr.mxu0 0.0
        %1071 = vmatpush1.msra.mxu0 0.0
        %1072 = vmatprep.subr.mxu0 0.0
        %1073 = vmatpush1.msra.mxu0 0.0
        %1074 = vmatprep.subr.mxu0 0.0
        %1075 = vmatpush1.msra.mxu0 %v1039
        %1076 = vmatprep.subr.mxu0 0.0
        %1077 = vmatpush2.msra.mxu0 0.0
        %1078 = vmatprep.subr.mxu0 0.0
        %1079 = vmatpush2.msra.mxu0 0.0
        %1080 = vmatprep.subr.mxu0 0.0
        %1081 = vmatpush2.msra.mxu0 0.0
        %1082 = vmatprep.subr.mxu0 0.0
        %1083 = vmatpush2.msra.mxu0 0.0
        %1084 = vmatprep.subr.mxu0 0.0
        %1085 = vmatpush2.msra.mxu0 0.0
        %1086 = vmatprep.subr.mxu0 0.0
        %1087 = vmatpush2.msra.mxu0 0.0
        %1088 = vmatprep.subr.mxu0 0.0
        %1089 = vmatpush2.msra.mxu0 0.0
        %1090 = vmatprep.subr.mxu0 0.0
        %1091 = vmatpush2.msra.mxu0 0.0
        %1092 = vmatprep.subr.mxu0 0.0
        %1093 = vmatpush2.msra.mxu0 0.0
        %1094 = vmatprep.subr.mxu0 0.0
        %1095 = vmatpush2.msra.mxu0 0.0
        %1096 = vmatprep.subr.mxu0 0.0
        %1097 = vmatpush2.msra.mxu0 0.0
        %1098 = vmatprep.subr.mxu0 0.0
        %1099 = vmatpush2.msra.mxu0 0.0
        %1100 = vmatprep.subr.mxu0 0.0
        %1101 = vmatpush2.msra.mxu0 0.0
        %1102 = vmatprep.subr.mxu0 0.0
        %1103 = vmatpush2.msra.mxu0 0.0
        %1104 = vmatprep.subr.mxu0 0.0
        %1105 = vmatpush2.msra.mxu0 0.0
        %1106 = vmatprep.subr.mxu0 0.0
        %1107 = vmatpush2.msra.mxu0 0.0
        %1108 = vmatprep.mubr.f32.mxu0 0.0
        %1109 = vmatmul.mubr.f32.gmra.mxu0 %v1042
        %v1110 = vpop.f32.mrf.mxu0
        %v1111 = vadd.f32 0.0, %v1110
        %v1112 = vpop.f32.mrf.mxu0
        %1113 = vdwg.mxu0
        %s1114 = scalar_lea.vmem [#allocation7], 2
        %v1115 = vld [vmem:[%s1114] sm:$0x1]
        %v1117 = vlaneseq
        %v1118 = vshrl.u32 %v1117, 7
        %v1119 = vsub.s32 0, %v1118
        %v1120 = vrot.slane %v1115, %v1119
        %v1122 = vmul.f32 %v390, %v1120
        %v1123 = vand.u32 2147483647, %v1122
        %vm1124 = vcmp.le.f32.partialorder %v1123, 0.7853982
        %vm1125 = vcmp.lt.s32.totalorder %v1122, 0
        %v1126 = vand.u32 %v1122, 2139095040
        %v1127 = vshrl.u32 %v1126, 23
        %v1128 = vsub.s32 %v1127, 127
        %v1129 = vand.u32 2147483647, %v1122
        %v1130 = vand.u32 %v1129, 8388607
        %v1131 = vor.u32 %v1130, 8388608
        %v1132 = vsub.s32 0, %v1131
        %v1133 = vadd.s32 %v1128, 1
        %vm1134 = vcmp.gt.s32.totalorder %v1133, 0
        %v1135 = vsel %vm1134, %v1133, 0
        %v1136 = vshrl.u32 %v1135, 5
        %v1137 = vand.u32 %v1135, 31
        %v1138 = vsub.s32 32, %v1137
        %v1139 = vshrl.u32 683565275, %v1138
        %v1140 = vshll.u32 683565275, %v1137
        %v1141 = vshrl.u32 2475754826, %v1138
        %v1142 = vor.u32 %v1140, %v1141
        %v1143 = vshll.u32 2475754826, %v1137
        %v1144 = vshrl.u32 2131351028, %v1138
        %v1145 = vor.u32 %v1143, %v1144
        %v1146 = vshll.u32 2131351028, %v1137
        %v1147 = vshrl.u32 2102212464, %v1138
        %v1148 = vor.u32 %v1146, %v1147
        %v1149 = vshll.u32 2102212464, %v1137
        %v1150 = vshrl.u32 920167782, %v1138
        %v1151 = vor.u32 %v1149, %v1150
        %v1152 = vshll.u32 920167782, %v1137
        %v1153 = vshrl.u32 1326507024, %v1138
        %v1154 = vor.u32 %v1152, %v1153
        %vm1155 = vcmp.lt.s32.totalorder %v1136, 1
        %vm1156 = vcmp.lt.s32.totalorder %v1136, 2
        %vm1157 = vcmp.lt.s32.totalorder %v1136, 3
        %vm1158 = vcmp.lt.s32.totalorder %v1136, 4
        %v1159 = vsel %vm1155, %v1139, %v1142
        %v1160 = vsel %vm1158, %v1148, 2102212464
        %v1161 = vsel %vm1157, %v1145, %v1160
        %v1162 = vsel %vm1156, %v1159, %v1161
        %v1163 = vsel %vm1155, %v1142, %v1145
        %v1164 = vsel %vm1158, %v1151, 920167782
        %v1165 = vsel %vm1157, %v1148, %v1164
        %v1166 = vsel %vm1156, %v1163, %v1165
        %v1167 = vsel %vm1155, %v1145, %v1148
        %v1168 = vsel %vm1158, %v1154, 1326507024
        %v1169 = vsel %vm1157, %v1151, %v1168
        %v1170 = vsel %vm1156, %v1167, %v1169
        %v1171 = vshll.u32 %v1131, 8
        %v1172 = vmul.u32.u64.compose %v1171, %v1170
        %v1173 = vextract.low.u32 %v1172
        %v1174 = vextract.high.u32 %v1172
        %v1175 = vmul.u32.u64.compose %v1171, %v1166
        %v1176 = vextract.low.u32 %v1175
        %v1177 = vextract.high.u32 %v1175
        %v1178 = vmul.u32 %v1171, %v1162
        %v1179 = vadd.s32 %v1174, %v1176
        %vm1180 = vc.u32 %v1174, %v1176
        %v1181 = vadd.s32 %v1177, 1
        %v1182 = vsel %vm1180, %v1181, %v1177
        %v1183 = vadd.s32 %v1178, %v1182
        %v1184 = vadd.s32 %v1183, 536870912
        %v1185 = vshrl.u32 %v1184, 30
        %v1186 = vshll.u32 %v1185, 30
        %v1187 = vsub.s32 %v1183, %v1186
        %vm1188 = vcmp.lt.s32.totalorder %v1187, 0
        %v1189 = vsub.s32 0, %v1187
        %v1190 = vsel %vm1188, %v1189, %v1187
        %v1191 = vclz %v1190
        %v1192 = vsub.s32 %v1191, 2
        %vm1193 = vcmp.gt.s32.totalorder 0, %v1192
        %v1194 = vsel %vm1193, 0, %v1192
        %v1195 = vsub.s32 32, %v1194
        %v1196 = vshll.u32 %v1187, %v1194
        %v1197 = vshrl.u32 %v1179, %v1195
        %v1198 = vor.u32 %v1196, %v1197
        %v1199 = vsub.s32 4294967266, %v1194
        %v1200 = vadd.s32 %v1199, 127
        %v1201 = vshll.u32 %v1200, 23
        %v1202 = vor.u32 4788187, %v1201
        %v1203 = vand.u32 2147483647, %v1202
        %v1205 = vcvt.s32.f32 %v1198
        %v1206 = vmul.f32 %v1205, %v1203
        %v1207 = vxor.u32 %v1206, 2147483648
        %v1208 = vsel %vm1125, %v1207, %v1206
        %v1209 = vsub.s32 4, %v1185
        %v1210 = vsel %vm1125, %v1209, %v1185
        %v1211 = vsel %vm1124, %v1122, %v1208
        %v1212 = vsel %vm1124, 0, %v1210
        %v1213 = vcosq.f32.pop %v1211
        %v1214 = vsinq.f32.pop %v1211
        %vm1215 = vweird.f32 %v1122
        %v1216 = vand.u32 %v1212, 3
        %vm1217 = vcmp.lt.s32.totalorder %v1216, 2
        %vm1218 = vcmp.eq.s32.totalorder %v1216, 0
        %v1219 = vxor.u32 %v1214, 2147483648
        %v1220 = vsel %vm1218, %v1213, %v1219
        %vm1221 = vcmp.eq.s32.totalorder %v1216, 2
        %v1222 = vxor.u32 %v1213, 2147483648
        %v1223 = vsel %vm1221, %v1222, %v1214
        %v1224 = vsel %vm1217, %v1220, %v1223
        %v1225 = vsel %vm1215, nan, %v1224
        %v1226 = vand.u32 2147483647, %v1122
        %vm1227 = vcmp.le.f32.partialorder %v1226, 0.7853982
        %vm1228 = vcmp.lt.s32.totalorder %v1122, 0
        %v1229 = vand.u32 %v1122, 2139095040
        %v1230 = vshrl.u32 %v1229, 23
        %v1231 = vsub.s32 %v1230, 127
        %v1232 = vand.u32 2147483647, %v1122
        %v1233 = vand.u32 %v1232, 8388607
        %v1234 = vor.u32 %v1233, 8388608
        %v1235 = vsub.s32 0, %v1234
        %v1236 = vadd.s32 %v1231, 1
        %vm1237 = vcmp.gt.s32.totalorder %v1236, 0
        %v1238 = vsel %vm1237, %v1236, 0
        %v1239 = vshrl.u32 %v1238, 5
        %v1240 = vand.u32 %v1238, 31
        %v1241 = vsub.s32 32, %v1240
        %v1242 = vshrl.u32 683565275, %v1241
        %v1243 = vshll.u32 683565275, %v1240
        %v1244 = vshrl.u32 2475754826, %v1241
        %v1245 = vor.u32 %v1243, %v1244
        %v1246 = vshll.u32 2475754826, %v1240
        %v1247 = vshrl.u32 2131351028, %v1241
        %v1248 = vor.u32 %v1246, %v1247
        %v1249 = vshll.u32 2131351028, %v1240
        %v1250 = vshrl.u32 2102212464, %v1241
        %v1251 = vor.u32 %v1249, %v1250
        %v1252 = vshll.u32 2102212464, %v1240
        %v1253 = vshrl.u32 920167782, %v1241
        %v1254 = vor.u32 %v1252, %v1253
        %v1255 = vshll.u32 920167782, %v1240
        %v1256 = vshrl.u32 1326507024, %v1241
        %v1257 = vor.u32 %v1255, %v1256
        %vm1258 = vcmp.lt.s32.totalorder %v1239, 1
        %vm1259 = vcmp.lt.s32.totalorder %v1239, 2
        %vm1260 = vcmp.lt.s32.totalorder %v1239, 3
        %vm1261 = vcmp.lt.s32.totalorder %v1239, 4
        %v1262 = vsel %vm1258, %v1242, %v1245
        %v1263 = vsel %vm1261, %v1251, 2102212464
        %v1264 = vsel %vm1260, %v1248, %v1263
        %v1265 = vsel %vm1259, %v1262, %v1264
        %v1266 = vsel %vm1258, %v1245, %v1248
        %v1267 = vsel %vm1261, %v1254, 920167782
        %v1268 = vsel %vm1260, %v1251, %v1267
        %v1269 = vsel %vm1259, %v1266, %v1268
        %v1270 = vsel %vm1258, %v1248, %v1251
        %v1271 = vsel %vm1261, %v1257, 1326507024
        %v1272 = vsel %vm1260, %v1254, %v1271
        %v1273 = vsel %vm1259, %v1270, %v1272
        %v1274 = vshll.u32 %v1234, 8
        %v1275 = vmul.u32.u64.compose %v1274, %v1273
        %v1276 = vextract.low.u32 %v1275
        %v1277 = vextract.high.u32 %v1275
        %v1278 = vmul.u32.u64.compose %v1274, %v1269
        %v1279 = vextract.low.u32 %v1278
        %v1280 = vextract.high.u32 %v1278
        %v1281 = vmul.u32 %v1274, %v1265
        %v1282 = vadd.s32 %v1277, %v1279
        %vm1283 = vc.u32 %v1277, %v1279
        %v1284 = vadd.s32 %v1280, 1
        %v1285 = vsel %vm1283, %v1284, %v1280
        %v1286 = vadd.s32 %v1281, %v1285
        %v1287 = vadd.s32 %v1286, 536870912
        %v1288 = vshrl.u32 %v1287, 30
        %v1289 = vshll.u32 %v1288, 30
        %v1290 = vsub.s32 %v1286, %v1289
        %vm1291 = vcmp.lt.s32.totalorder %v1290, 0
        %v1292 = vsub.s32 0, %v1290
        %v1293 = vsel %vm1291, %v1292, %v1290
        %v1294 = vclz %v1293
        %v1295 = vsub.s32 %v1294, 2
        %vm1296 = vcmp.gt.s32.totalorder 0, %v1295
        %v1297 = vsel %vm1296, 0, %v1295
        %v1298 = vsub.s32 32, %v1297
        %v1299 = vshll.u32 %v1290, %v1297
        %v1300 = vshrl.u32 %v1282, %v1298
        %v1301 = vor.u32 %v1299, %v1300
        %v1302 = vsub.s32 4294967266, %v1297
        %v1303 = vadd.s32 %v1302, 127
        %v1304 = vshll.u32 %v1303, 23
        %v1305 = vor.u32 4788187, %v1304
        %v1306 = vand.u32 2147483647, %v1305
        %v1308 = vcvt.s32.f32 %v1301
        %v1309 = vmul.f32 %v1308, %v1306
        %v1310 = vxor.u32 %v1309, 2147483648
        %v1311 = vsel %vm1228, %v1310, %v1309
        %v1312 = vsub.s32 4, %v1288
        %v1313 = vsel %vm1228, %v1312, %v1288
        %v1314 = vsel %vm1227, %v1122, %v1311
        %v1315 = vsel %vm1227, 0, %v1313
        %v1316 = vcosq.f32.pop %v1314
        %v1317 = vsinq.f32.pop %v1314
        %vm1318 = vweird.f32 %v1122
        %v1319 = vadd.s32 %v1315, 3
        %v1320 = vand.u32 %v1319, 3
        %vm1321 = vcmp.lt.s32.totalorder %v1320, 2
        %vm1322 = vcmp.eq.s32.totalorder %v1320, 0
        %v1323 = vxor.u32 %v1317, 2147483648
        %v1324 = vsel %vm1322, %v1316, %v1323
        %vm1325 = vcmp.eq.s32.totalorder %v1320, 2
        %v1326 = vxor.u32 %v1316, 2147483648
        %v1327 = vsel %vm1325, %v1326, %v1317
        %v1328 = vsel %vm1321, %v1324, %v1327
        %v1329 = vsel %vm1318, nan, %v1328
        %v1330 = vmul.f32 %v1111, %v1225
        %s1331 = scalar_lea.vmem %s354, 16 [#allocation8]
        %1332 = vst.msk [vmem:[%s1331] sm:$0xff] %vm392, %v1330
        %v1333 = vmul.f32 %v1111, %v1329
        %s1334 = scalar_lea.vmem %s361, 16 [#allocation9]
        %1335 = vst.msk [vmem:[%s1334] sm:$0xff] %vm392, %v1333
        %1337 = vrot.lane.b32.xlu0 %v1225, 8
        %v1338 = vpop.permute.xlu0 %1337
        %v1340 = vmul.f32 %v1111, %v1338
        %1342 = vrot.lane.b32.xlu0 %v1340, 120
        %v1343 = vpop.permute.xlu0 %1342
        %s1345 = scalar_lea.vmem %s368, 16 [#allocation11]
        %1346 = vst.msk [vmem:[%s1345] sm:$0xff] %vm392, %v1343
        %1348 = vrot.lane.b32.xlu0 %v1329, 8
        %v1349 = vpop.permute.xlu0 %1348
        %v1351 = vmul.f32 %v1111, %v1349
        %v1352 = vsub.f32 0.0, %v1351
        %1354 = vrot.lane.b32.xlu0 %v1352, 120
        %v1355 = vpop.permute.xlu0 %1354
        %s1357 = scalar_lea.vmem %s375, 16 [#allocation12]
        %1358 = vst.msk [vmem:[%s1357] sm:$0xff] %vm392, %v1355
        %1360 = vrot.lane.b32.xlu0 %v1111, 112
        %v1361 = vpop.permute.xlu0 %1360
        %s1363 = scalar_lea.vmem %s382, 16 [#allocation14]
        %1364 = vst.msk [vmem:[%s1363] sm:$0xff] %vm392, %v1361
        %s1365 = scalar_lea.vmem [#allocation5], 24
        %v1366 = vld [vmem:[%s1365] sm:$0xff]
        %1367 = vrot.lane.b32.xlu0 %v383, 104
        %v1368 = vpop.permute.xlu0 %1367
        %v1369 = vsel %vm392, %v1368, 0
        %1371 = vmatprep.subr.mxu0 0.0
        %1372 = vmatpush1.msra.mxu0 0.0
        %1373 = vmatprep.subr.mxu0 0.0
        %1374 = vmatpush1.msra.mxu0 0.0
        %1375 = vmatprep.subr.mxu0 0.0
        %1376 = vmatpush1.msra.mxu0 0.0
        %1377 = vmatprep.subr.mxu0 0.0
        %1378 = vmatpush1.msra.mxu0 0.0
        %1379 = vmatprep.subr.mxu0 0.0
        %1380 = vmatpush1.msra.mxu0 0.0
        %1381 = vmatprep.subr.mxu0 0.0
        %1382 = vmatpush1.msra.mxu0 0.0
        %1383 = vmatprep.subr.mxu0 0.0
        %1384 = vmatpush1.msra.mxu0 0.0
        %1385 = vmatprep.subr.mxu0 0.0
        %1386 = vmatpush1.msra.mxu0 0.0
        %1387 = vmatprep.subr.mxu0 0.0
        %1388 = vmatpush1.msra.mxu0 0.0
        %1389 = vmatprep.subr.mxu0 0.0
        %1390 = vmatpush1.msra.mxu0 0.0
        %1391 = vmatprep.subr.mxu0 0.0
        %1392 = vmatpush1.msra.mxu0 0.0
        %1393 = vmatprep.subr.mxu0 0.0
        %1394 = vmatpush1.msra.mxu0 0.0
        %1395 = vmatprep.subr.mxu0 0.0
        %1396 = vmatpush1.msra.mxu0 0.0
        %1397 = vmatprep.subr.mxu0 0.0
        %1398 = vmatpush1.msra.mxu0 0.0
        %1399 = vmatprep.subr.mxu0 0.0
        %1400 = vmatpush1.msra.mxu0 0.0
        %1401 = vmatprep.subr.mxu0 0.0
        %1402 = vmatpush1.msra.mxu0 %v1366
        %1403 = vmatprep.subr.mxu0 0.0
        %1404 = vmatpush2.msra.mxu0 0.0
        %1405 = vmatprep.subr.mxu0 0.0
        %1406 = vmatpush2.msra.mxu0 0.0
        %1407 = vmatprep.subr.mxu0 0.0
        %1408 = vmatpush2.msra.mxu0 0.0
        %1409 = vmatprep.subr.mxu0 0.0
        %1410 = vmatpush2.msra.mxu0 0.0
        %1411 = vmatprep.subr.mxu0 0.0
        %1412 = vmatpush2.msra.mxu0 0.0
        %1413 = vmatprep.subr.mxu0 0.0
        %1414 = vmatpush2.msra.mxu0 0.0
        %1415 = vmatprep.subr.mxu0 0.0
        %1416 = vmatpush2.msra.mxu0 0.0
        %1417 = vmatprep.subr.mxu0 0.0
        %1418 = vmatpush2.msra.mxu0 0.0
        %1419 = vmatprep.subr.mxu0 0.0
        %1420 = vmatpush2.msra.mxu0 0.0
        %1421 = vmatprep.subr.mxu0 0.0
        %1422 = vmatpush2.msra.mxu0 0.0
        %1423 = vmatprep.subr.mxu0 0.0
        %1424 = vmatpush2.msra.mxu0 0.0
        %1425 = vmatprep.subr.mxu0 0.0
        %1426 = vmatpush2.msra.mxu0 0.0
        %1427 = vmatprep.subr.mxu0 0.0
        %1428 = vmatpush2.msra.mxu0 0.0
        %1429 = vmatprep.subr.mxu0 0.0
        %1430 = vmatpush2.msra.mxu0 0.0
        %1431 = vmatprep.subr.mxu0 0.0
        %1432 = vmatpush2.msra.mxu0 0.0
        %1433 = vmatprep.subr.mxu0 0.0
        %1434 = vmatpush2.msra.mxu0 0.0
        %1435 = vmatprep.mubr.f32.mxu0 0.0
        %1436 = vmatmul.mubr.f32.gmra.mxu0 %v1369
        %v1437 = vpop.f32.mrf.mxu0
        %v1438 = vadd.f32 0.0, %v1437
        %v1439 = vpop.f32.mrf.mxu0
        %1440 = vdwg.mxu0
        %s1441 = scalar_lea.vmem [#allocation7], 3
        %v1442 = vld [vmem:[%s1441] sm:$0x1]
        %v1444 = vlaneseq
        %v1445 = vshrl.u32 %v1444, 7
        %v1446 = vsub.s32 0, %v1445
        %v1447 = vrot.slane %v1442, %v1446
        %v1449 = vmul.f32 %v390, %v1447
        %v1450 = vand.u32 2147483647, %v1449
        %vm1451 = vcmp.le.f32.partialorder %v1450, 0.7853982
        %vm1452 = vcmp.lt.s32.totalorder %v1449, 0
        %v1453 = vand.u32 %v1449, 2139095040
        %v1454 = vshrl.u32 %v1453, 23
        %v1455 = vsub.s32 %v1454, 127
        %v1456 = vand.u32 2147483647, %v1449
        %v1457 = vand.u32 %v1456, 8388607
        %v1458 = vor.u32 %v1457, 8388608
        %v1459 = vsub.s32 0, %v1458
        %v1460 = vadd.s32 %v1455, 1
        %vm1461 = vcmp.gt.s32.totalorder %v1460, 0
        %v1462 = vsel %vm1461, %v1460, 0
        %v1463 = vshrl.u32 %v1462, 5
        %v1464 = vand.u32 %v1462, 31
        %v1465 = vsub.s32 32, %v1464
        %v1466 = vshrl.u32 683565275, %v1465
        %v1467 = vshll.u32 683565275, %v1464
        %v1468 = vshrl.u32 2475754826, %v1465
        %v1469 = vor.u32 %v1467, %v1468
        %v1470 = vshll.u32 2475754826, %v1464
        %v1471 = vshrl.u32 2131351028, %v1465
        %v1472 = vor.u32 %v1470, %v1471
        %v1473 = vshll.u32 2131351028, %v1464
        %v1474 = vshrl.u32 2102212464, %v1465
        %v1475 = vor.u32 %v1473, %v1474
        %v1476 = vshll.u32 2102212464, %v1464
        %v1477 = vshrl.u32 920167782, %v1465
        %v1478 = vor.u32 %v1476, %v1477
        %v1479 = vshll.u32 920167782, %v1464
        %v1480 = vshrl.u32 1326507024, %v1465
        %v1481 = vor.u32 %v1479, %v1480
        %vm1482 = vcmp.lt.s32.totalorder %v1463, 1
        %vm1483 = vcmp.lt.s32.totalorder %v1463, 2
        %vm1484 = vcmp.lt.s32.totalorder %v1463, 3
        %vm1485 = vcmp.lt.s32.totalorder %v1463, 4
        %v1486 = vsel %vm1482, %v1466, %v1469
        %v1487 = vsel %vm1485, %v1475, 2102212464
        %v1488 = vsel %vm1484, %v1472, %v1487
        %v1489 = vsel %vm1483, %v1486, %v1488
        %v1490 = vsel %vm1482, %v1469, %v1472
        %v1491 = vsel %vm1485, %v1478, 920167782
        %v1492 = vsel %vm1484, %v1475, %v1491
        %v1493 = vsel %vm1483, %v1490, %v1492
        %v1494 = vsel %vm1482, %v1472, %v1475
        %v1495 = vsel %vm1485, %v1481, 1326507024
        %v1496 = vsel %vm1484, %v1478, %v1495
        %v1497 = vsel %vm1483, %v1494, %v1496
        %v1498 = vshll.u32 %v1458, 8
        %v1499 = vmul.u32.u64.compose %v1498, %v1497
        %v1500 = vextract.low.u32 %v1499
        %v1501 = vextract.high.u32 %v1499
        %v1502 = vmul.u32.u64.compose %v1498, %v1493
        %v1503 = vextract.low.u32 %v1502
        %v1504 = vextract.high.u32 %v1502
        %v1505 = vmul.u32 %v1498, %v1489
        %v1506 = vadd.s32 %v1501, %v1503
        %vm1507 = vc.u32 %v1501, %v1503
        %v1508 = vadd.s32 %v1504, 1
        %v1509 = vsel %vm1507, %v1508, %v1504
        %v1510 = vadd.s32 %v1505, %v1509
        %v1511 = vadd.s32 %v1510, 536870912
        %v1512 = vshrl.u32 %v1511, 30
        %v1513 = vshll.u32 %v1512, 30
        %v1514 = vsub.s32 %v1510, %v1513
        %vm1515 = vcmp.lt.s32.totalorder %v1514, 0
        %v1516 = vsub.s32 0, %v1514
        %v1517 = vsel %vm1515, %v1516, %v1514
        %v1518 = vclz %v1517
        %v1519 = vsub.s32 %v1518, 2
        %vm1520 = vcmp.gt.s32.totalorder 0, %v1519
        %v1521 = vsel %vm1520, 0, %v1519
        %v1522 = vsub.s32 32, %v1521
        %v1523 = vshll.u32 %v1514, %v1521
        %v1524 = vshrl.u32 %v1506, %v1522
        %v1525 = vor.u32 %v1523, %v1524
        %v1526 = vsub.s32 4294967266, %v1521
        %v1527 = vadd.s32 %v1526, 127
        %v1528 = vshll.u32 %v1527, 23
        %v1529 = vor.u32 4788187, %v1528
        %v1530 = vand.u32 2147483647, %v1529
        %v1532 = vcvt.s32.f32 %v1525
        %v1533 = vmul.f32 %v1532, %v1530
        %v1534 = vxor.u32 %v1533, 2147483648
        %v1535 = vsel %vm1452, %v1534, %v1533
        %v1536 = vsub.s32 4, %v1512
        %v1537 = vsel %vm1452, %v1536, %v1512
        %v1538 = vsel %vm1451, %v1449, %v1535
        %v1539 = vsel %vm1451, 0, %v1537
        %v1540 = vcosq.f32.pop %v1538
        %v1541 = vsinq.f32.pop %v1538
        %vm1542 = vweird.f32 %v1449
        %v1543 = vand.u32 %v1539, 3
        %vm1544 = vcmp.lt.s32.totalorder %v1543, 2
        %vm1545 = vcmp.eq.s32.totalorder %v1543, 0
        %v1546 = vxor.u32 %v1541, 2147483648
        %v1547 = vsel %vm1545, %v1540, %v1546
        %vm1548 = vcmp.eq.s32.totalorder %v1543, 2
        %v1549 = vxor.u32 %v1540, 2147483648
        %v1550 = vsel %vm1548, %v1549, %v1541
        %v1551 = vsel %vm1544, %v1547, %v1550
        %v1552 = vsel %vm1542, nan, %v1551
        %v1553 = vand.u32 2147483647, %v1449
        %vm1554 = vcmp.le.f32.partialorder %v1553, 0.7853982
        %vm1555 = vcmp.lt.s32.totalorder %v1449, 0
        %v1556 = vand.u32 %v1449, 2139095040
        %v1557 = vshrl.u32 %v1556, 23
        %v1558 = vsub.s32 %v1557, 127
        %v1559 = vand.u32 2147483647, %v1449
        %v1560 = vand.u32 %v1559, 8388607
        %v1561 = vor.u32 %v1560, 8388608
        %v1562 = vsub.s32 0, %v1561
        %v1563 = vadd.s32 %v1558, 1
        %vm1564 = vcmp.gt.s32.totalorder %v1563, 0
        %v1565 = vsel %vm1564, %v1563, 0
        %v1566 = vshrl.u32 %v1565, 5
        %v1567 = vand.u32 %v1565, 31
        %v1568 = vsub.s32 32, %v1567
        %v1569 = vshrl.u32 683565275, %v1568
        %v1570 = vshll.u32 683565275, %v1567
        %v1571 = vshrl.u32 2475754826, %v1568
        %v1572 = vor.u32 %v1570, %v1571
        %v1573 = vshll.u32 2475754826, %v1567
        %v1574 = vshrl.u32 2131351028, %v1568
        %v1575 = vor.u32 %v1573, %v1574
        %v1576 = vshll.u32 2131351028, %v1567
        %v1577 = vshrl.u32 2102212464, %v1568
        %v1578 = vor.u32 %v1576, %v1577
        %v1579 = vshll.u32 2102212464, %v1567
        %v1580 = vshrl.u32 920167782, %v1568
        %v1581 = vor.u32 %v1579, %v1580
        %v1582 = vshll.u32 920167782, %v1567
        %v1583 = vshrl.u32 1326507024, %v1568
        %v1584 = vor.u32 %v1582, %v1583
        %vm1585 = vcmp.lt.s32.totalorder %v1566, 1
        %vm1586 = vcmp.lt.s32.totalorder %v1566, 2
        %vm1587 = vcmp.lt.s32.totalorder %v1566, 3
        %vm1588 = vcmp.lt.s32.totalorder %v1566, 4
        %v1589 = vsel %vm1585, %v1569, %v1572
        %v1590 = vsel %vm1588, %v1578, 2102212464
        %v1591 = vsel %vm1587, %v1575, %v1590
        %v1592 = vsel %vm1586, %v1589, %v1591
        %v1593 = vsel %vm1585, %v1572, %v1575
        %v1594 = vsel %vm1588, %v1581, 920167782
        %v1595 = vsel %vm1587, %v1578, %v1594
        %v1596 = vsel %vm1586, %v1593, %v1595
        %v1597 = vsel %vm1585, %v1575, %v1578
        %v1598 = vsel %vm1588, %v1584, 1326507024
        %v1599 = vsel %vm1587, %v1581, %v1598
        %v1600 = vsel %vm1586, %v1597, %v1599
        %v1601 = vshll.u32 %v1561, 8
        %v1602 = vmul.u32.u64.compose %v1601, %v1600
        %v1603 = vextract.low.u32 %v1602
        %v1604 = vextract.high.u32 %v1602
        %v1605 = vmul.u32.u64.compose %v1601, %v1596
        %v1606 = vextract.low.u32 %v1605
        %v1607 = vextract.high.u32 %v1605
        %v1608 = vmul.u32 %v1601, %v1592
        %v1609 = vadd.s32 %v1604, %v1606
        %vm1610 = vc.u32 %v1604, %v1606
        %v1611 = vadd.s32 %v1607, 1
        %v1612 = vsel %vm1610, %v1611, %v1607
        %v1613 = vadd.s32 %v1608, %v1612
        %v1614 = vadd.s32 %v1613, 536870912
        %v1615 = vshrl.u32 %v1614, 30
        %v1616 = vshll.u32 %v1615, 30
        %v1617 = vsub.s32 %v1613, %v1616
        %vm1618 = vcmp.lt.s32.totalorder %v1617, 0
        %v1619 = vsub.s32 0, %v1617
        %v1620 = vsel %vm1618, %v1619, %v1617
        %v1621 = vclz %v1620
        %v1622 = vsub.s32 %v1621, 2
        %vm1623 = vcmp.gt.s32.totalorder 0, %v1622
        %v1624 = vsel %vm1623, 0, %v1622
        %v1625 = vsub.s32 32, %v1624
        %v1626 = vshll.u32 %v1617, %v1624
        %v1627 = vshrl.u32 %v1609, %v1625
        %v1628 = vor.u32 %v1626, %v1627
        %v1629 = vsub.s32 4294967266, %v1624
        %v1630 = vadd.s32 %v1629, 127
        %v1631 = vshll.u32 %v1630, 23
        %v1632 = vor.u32 4788187, %v1631
        %v1633 = vand.u32 2147483647, %v1632
        %v1635 = vcvt.s32.f32 %v1628
        %v1636 = vmul.f32 %v1635, %v1633
        %v1637 = vxor.u32 %v1636, 2147483648
        %v1638 = vsel %vm1555, %v1637, %v1636
        %v1639 = vsub.s32 4, %v1615
        %v1640 = vsel %vm1555, %v1639, %v1615
        %v1641 = vsel %vm1554, %v1449, %v1638
        %v1642 = vsel %vm1554, 0, %v1640
        %v1643 = vcosq.f32.pop %v1641
        %v1644 = vsinq.f32.pop %v1641
        %vm1645 = vweird.f32 %v1449
        %v1646 = vadd.s32 %v1642, 3
        %v1647 = vand.u32 %v1646, 3
        %vm1648 = vcmp.lt.s32.totalorder %v1647, 2
        %vm1649 = vcmp.eq.s32.totalorder %v1647, 0
        %v1650 = vxor.u32 %v1644, 2147483648
        %v1651 = vsel %vm1649, %v1643, %v1650
        %vm1652 = vcmp.eq.s32.totalorder %v1647, 2
        %v1653 = vxor.u32 %v1643, 2147483648
        %v1654 = vsel %vm1652, %v1653, %v1644
        %v1655 = vsel %vm1648, %v1651, %v1654
        %v1656 = vsel %vm1645, nan, %v1655
        %v1657 = vmul.f32 %v1438, %v1552
        %s1658 = scalar_lea.vmem %s354, 24 [#allocation8]
        %1659 = vst.msk [vmem:[%s1658] sm:$0xff] %vm392, %v1657
        %v1660 = vmul.f32 %v1438, %v1656
        %s1661 = scalar_lea.vmem %s361, 24 [#allocation9]
        %1662 = vst.msk [vmem:[%s1661] sm:$0xff] %vm392, %v1660
        %1664 = vrot.lane.b32.xlu0 %v1552, 8
        %v1665 = vpop.permute.xlu0 %1664
        %v1667 = vmul.f32 %v1438, %v1665
        %1669 = vrot.lane.b32.xlu0 %v1667, 120
        %v1670 = vpop.permute.xlu0 %1669
        %s1672 = scalar_lea.vmem %s368, 24 [#allocation11]
        %1673 = vst.msk [vmem:[%s1672] sm:$0xff] %vm392, %v1670
        %1675 = vrot.lane.b32.xlu0 %v1656, 8
        %v1676 = vpop.permute.xlu0 %1675
        %v1678 = vmul.f32 %v1438, %v1676
        %v1679 = vsub.f32 0.0, %v1678
        %1681 = vrot.lane.b32.xlu0 %v1679, 120
        %v1682 = vpop.permute.xlu0 %1681
        %s1684 = scalar_lea.vmem %s375, 24 [#allocation12]
        %1685 = vst.msk [vmem:[%s1684] sm:$0xff] %vm392, %v1682
        %1687 = vrot.lane.b32.xlu0 %v1438, 112
        %v1688 = vpop.permute.xlu0 %1687
        %s1690 = scalar_lea.vmem %s382, 24 [#allocation14]
        %1691 = vst.msk [vmem:[%s1690] sm:$0xff] %vm392, %v1688
        %s1692 = sand.u32 %s124, 1
        %s1693 = scalar_lea.sflag [#allocation4], %s1692
        %s1694 = sand.u32 %s124, 1
        %s1695 = smul.addr %s1694, 32
        %s1696 = scalar_lea.vmem [#allocation8], %s1695
        %s1697 = sand.u32 %s32, 1
        %s1698 = scalar_lea.sflag [#allocation10], %s1697
        %s1699 = sand.u32 %s152, 1
        %s1700 = smul.addr %s1699, 32
        %s1701 = scalar_lea.vmem [#allocation9], %s1700
        %s1702 = sand.u32 %s32, 1
        %s1703 = scalar_lea.sflag [#allocation10], %s1702
        %s1704 = sand.u32 %s180, 1
        %s1705 = smul.addr %s1704, 32
        %s1706 = scalar_lea.vmem [#allocation11], %s1705
        %s1707 = sand.u32 %s32, 1
        %s1708 = scalar_lea.sflag [#allocation13], %s1707
        %s1709 = sand.u32 %s208, 1
        %s1710 = smul.addr %s1709, 32
        %s1711 = scalar_lea.vmem [#allocation12], %s1710
        %s1712 = sand.u32 %s32, 1
        %s1713 = scalar_lea.sflag [#allocation13], %s1712
        %s1714 = sand.u32 %s236, 1
        %s1715 = smul.addr %s1714, 32
        %s1716 = scalar_lea.vmem [#allocation14], %s1715
        // Predicated region
        $region45: #{tpu_custom_call.1} parent=31 // pred_check
          %p1717 = pneg %p134
        $region46: #{tpu_custom_call.1} parent=31 // pred_check_branch
          %1719 = sbr.rel (%p1717) target = $region48
        $region47: #{tpu_custom_call.1} parent=31 // pred_region
          %s1721 = ssub.s32 512, 512
          %1722 = vsyncadd %s1693, %s1721
          %s1723 = smul.addr %s36, 4
          %s1724 = sadd.s32 %s37, %s1723
          %s1725 = smul.addr %s1724, 128
          %s1726 = scalar_lea.hbm %s3, %s1725
          %s1727 = sshll.u32 %s1696, 4
          %s1728 = int_to_ptr.vmem [resolvable:$true] %s1727
          %1733 = dma.vmem_to_hbm [thread:$0]  %s1728, 512, %s1726, %s1693, 128, 128, 8
        $region48: #{tpu_custom_call.1} parent=31 // pred_fallthru
          _
        // Predicated region
        $region49: #{tpu_custom_call.1} parent=31 // pred_check
          %p1734 = pneg %p162
        $region50: #{tpu_custom_call.1} parent=31 // pred_check_branch
          %1736 = sbr.rel (%p1734) target = $region52
        $region51: #{tpu_custom_call.1} parent=31 // pred_region
          %s1738 = ssub.s32 512, 512
          %1739 = vsyncadd %s1698, %s1738
          %s1740 = smul.addr %s36, 4
          %s1741 = sadd.s32 %s37, %s1740
          %s1742 = smul.addr %s1741, 128
          %s1743 = scalar_lea.hbm %s4, %s1742
          %s1744 = sshll.u32 %s1701, 4
          %s1745 = int_to_ptr.vmem [resolvable:$true] %s1744
          %1750 = dma.vmem_to_hbm [thread:$0]  %s1745, 512, %s1743, %s1698, 128, 128, 8
        $region52: #{tpu_custom_call.1} parent=31 // pred_fallthru
          _
        // Predicated region
        $region53: #{tpu_custom_call.1} parent=31 // pred_check
          %p1751 = pneg %p190
        $region54: #{tpu_custom_call.1} parent=31 // pred_check_branch
          %1753 = sbr.rel (%p1751) target = $region56
        $region55: #{tpu_custom_call.1} parent=31 // pred_region
          %s1755 = ssub.s32 512, 512
          %1756 = vsyncadd %s1703, %s1755
          %s1757 = smul.addr %s36, 4
          %s1758 = sadd.s32 %s37, %s1757
          %s1759 = smul.addr %s1758, 128
          %s1760 = scalar_lea.hbm %s5, %s1759
          %s1761 = sshll.u32 %s1706, 4
          %s1762 = int_to_ptr.vmem [resolvable:$true] %s1761
          %1767 = dma.vmem_to_hbm [thread:$0]  %s1762, 512, %s1760, %s1703, 128, 128, 8
        $region56: #{tpu_custom_call.1} parent=31 // pred_fallthru
          _
        // Predicated region
        $region57: #{tpu_custom_call.1} parent=31 // pred_check
          %p1768 = pneg %p218
        $region58: #{tpu_custom_call.1} parent=31 // pred_check_branch
          %1770 = sbr.rel (%p1768) target = $region60
        $region59: #{tpu_custom_call.1} parent=31 // pred_region
          %s1772 = ssub.s32 512, 512
          %1773 = vsyncadd %s1708, %s1772
          %s1774 = smul.addr %s36, 4
          %s1775 = sadd.s32 %s37, %s1774
          %s1776 = smul.addr %s1775, 128
          %s1777 = scalar_lea.hbm %s6, %s1776
          %s1778 = sshll.u32 %s1711, 4
          %s1779 = int_to_ptr.vmem [resolvable:$true] %s1778
          %1784 = dma.vmem_to_hbm [thread:$0]  %s1779, 512, %s1777, %s1708, 128, 128, 8
        $region60: #{tpu_custom_call.1} parent=31 // pred_fallthru
          _
        // Predicated region
        $region61: #{tpu_custom_call.1} parent=31 // pred_check
          %p1785 = pneg %p246
        $region62: #{tpu_custom_call.1} parent=31 // pred_check_branch
          %1787 = sbr.rel (%p1785) target = $region64
        $region63: #{tpu_custom_call.1} parent=31 // pred_region
          %s1789 = ssub.s32 512, 512
          %1790 = vsyncadd %s1713, %s1789
          %s1791 = smul.addr %s36, 4
          %s1792 = sadd.s32 %s37, %s1791
          %s1793 = smul.addr %s1792, 128
          %s1794 = scalar_lea.hbm %s7, %s1793
          %s1795 = sshll.u32 %s1716, 4
          %s1796 = int_to_ptr.vmem [resolvable:$true] %s1795
          %1801 = dma.vmem_to_hbm [thread:$0]  %s1796, 512, %s1794, %s1713, 128, 128, 8
        $region64: #{tpu_custom_call.1} parent=31 // pred_fallthru
          _
      $region32: #{tpu_custom_call.1} parent=5 // pred_fallthru
        _
      %p1802 = scmp.le.s32.totalorder 2, %s27
      // Predicated region
      $region65: #{tpu_custom_call.1} parent=5 // pred_check
        %p1803 = pneg %p1802
      $region66: #{tpu_custom_call.1} parent=5 // pred_check_branch
        %1805 = sbr.rel (%p1803) target = $region68
      $region67: #{tpu_custom_call.1} parent=5 // pred_region
        %s1806 = ssub.s32 %s27, 2
        // Predicated region
        $region69: #{tpu_custom_call.1} parent=67 // pred_check
          %p1807 = pneg %p140
        $region70: #{tpu_custom_call.1} parent=67 // pred_check_branch
          %1809 = sbr.rel (%p1807) target = $region72
        $region71: #{tpu_custom_call.1} parent=67 // pred_region
          %s1810 = sand.u32 %s125, 1
          %s1811 = scalar_lea.sflag [#allocation4], %s1810
          %s1812 = sand.u32 %s125, 1
          %s1813 = smul.addr %s1812, 32
          %s1814 = scalar_lea.vmem [#allocation8], %s1813
          %1815 = dma.done %s1811, 512
        $region72: #{tpu_custom_call.1} parent=67 // pred_fallthru
          _
        // Predicated region
        $region73: #{tpu_custom_call.1} parent=67 // pred_check
          %p1816 = pneg %p168
        $region74: #{tpu_custom_call.1} parent=67 // pred_check_branch
          %1818 = sbr.rel (%p1816) target = $region76
        $region75: #{tpu_custom_call.1} parent=67 // pred_region
          %s1819 = sand.u32 %s33, 1
          %s1820 = scalar_lea.sflag [#allocation10], %s1819
          %s1821 = sand.u32 %s153, 1
          %s1822 = smul.addr %s1821, 32
          %s1823 = scalar_lea.vmem [#allocation9], %s1822
          %1824 = dma.done %s1820, 512
        $region76: #{tpu_custom_call.1} parent=67 // pred_fallthru
          _
        // Predicated region
        $region77: #{tpu_custom_call.1} parent=67 // pred_check
          %p1825 = pneg %p196
        $region78: #{tpu_custom_call.1} parent=67 // pred_check_branch
          %1827 = sbr.rel (%p1825) target = $region80
        $region79: #{tpu_custom_call.1} parent=67 // pred_region
          %s1828 = sand.u32 %s33, 1
          %s1829 = scalar_lea.sflag [#allocation10], %s1828
          %s1830 = sand.u32 %s181, 1
          %s1831 = smul.addr %s1830, 32
          %s1832 = scalar_lea.vmem [#allocation11], %s1831
          %1833 = dma.done %s1829, 512
        $region80: #{tpu_custom_call.1} parent=67 // pred_fallthru
          _
        // Predicated region
        $region81: #{tpu_custom_call.1} parent=67 // pred_check
          %p1834 = pneg %p224
        $region82: #{tpu_custom_call.1} parent=67 // pred_check_branch
          %1836 = sbr.rel (%p1834) target = $region84
        $region83: #{tpu_custom_call.1} parent=67 // pred_region
          %s1837 = sand.u32 %s33, 1
          %s1838 = scalar_lea.sflag [#allocation13], %s1837
          %s1839 = sand.u32 %s209, 1
          %s1840 = smul.addr %s1839, 32
          %s1841 = scalar_lea.vmem [#allocation12], %s1840
          %1842 = dma.done %s1838, 512
        $region84: #{tpu_custom_call.1} parent=67 // pred_fallthru
          _
        // Predicated region
        $region85: #{tpu_custom_call.1} parent=67 // pred_check
          %p1843 = pneg %p252
        $region86: #{tpu_custom_call.1} parent=67 // pred_check_branch
          %1845 = sbr.rel (%p1843) target = $region88
        $region87: #{tpu_custom_call.1} parent=67 // pred_region
          %s1846 = sand.u32 %s33, 1
          %s1847 = scalar_lea.sflag [#allocation13], %s1846
          %s1848 = sand.u32 %s237, 1
          %s1849 = smul.addr %s1848, 32
          %s1850 = scalar_lea.vmem [#allocation14], %s1849
          %1851 = dma.done %s1847, 512
        $region88: #{tpu_custom_call.1} parent=67 // pred_fallthru
          _
      $region68: #{tpu_custom_call.1} parent=5 // pred_fallthru
        _
    $region6: #{tpu_custom_call.1} parent=1 // loop_footer
      %s31 = sadd.s32 1, %s27
    $region7: #{tpu_custom_call.1} parent=1 // loop_footer_branch
      %26 = sbr.rel target = $region3
    $region8: #{tpu_custom_call.1} parent=1 // loop_exit
      _
    %1852 = vsyncpa [#allocation3], 1
    %s1853 = scalar_lea.sflag [#allocation3], 1
    %1854 = vsyncpa %s1853, 1
    %1855 = vsyncpa [#allocation6], 1
    %1856 = vsyncpa [#allocation4], 1
    %s1857 = scalar_lea.sflag [#allocation4], 1
    %1858 = vsyncpa %s1857, 1
    %1859 = vsyncpa [#allocation10], 1
    %s1860 = scalar_lea.sflag [#allocation10], 1
    %1861 = vsyncpa %s1860, 1
    %1862 = vsyncpa [#allocation13], 1
    %s1863 = scalar_lea.sflag [#allocation13], 1
    %1864 = vsyncpa %s1863, 1

</llo_original>
